<compile_context>
chip_gen: v7x
topology: tpu7x:2x2x1
jax: 0.10.0
libtpu: 0.0.40
codegen_flags: <defaults>
</compile_context>

<pallas_src>
import functools

import jax
import jax.numpy as jnp
from jax import lax
from jax.experimental import pallas as pl
from jax.experimental.pallas import tpu as pltpu


def _round_up(x, m):
    return ((x + m - 1) // m) * m


def _vmem_limit_bytes():
    # Generation-gated scoped-VMEM limit: ~3/4 of physical VMEM, capped at 96 MiB
    # (=> 96 MiB on v5e/v6e's 128 MiB, 48 MiB on v7x's 64 MiB).  Falls back to a
    # universally safe 48 MiB if the query is unavailable.
    try:
        phys = int(pltpu.get_tpu_info().vmem_capacity_bytes)
    except Exception:
        phys = 64 * 1024 * 1024
    return max(32 * 1024 * 1024, min((phys * 3) // 4, 96 * 1024 * 1024))


def _pick_row_tile(total_rows, step_bytes_fn, budget):
    """Largest divisor R of total_rows whose estimated per-step VMEM footprint fits."""
    best = 1
    for r in range(1, total_rows + 1):
        if total_rows % r == 0 and step_bytes_fn(r) <= budget:
            best = r
    return best


def _conv_step_bytes(r, *, wp, ck, cout, wo, kh):
    """Rough per-grid-step VMEM footprint of the conv kernel for row tile r."""
    ckl, col = _round_up(ck, 128), _round_up(cout, 128)
    in_rows = r + kh - 1
    b = 2 * r * wp * ckl * 2                       # x row-tile block (bf16, double-buffered)
    b += 2 * (kh - 1) * wp * ckl * 2               # single-row halo blocks (double-buffered)
    b += in_rows * wp * ckl * 2                    # concatenated bf16 window
    b += r * wp * col * 4                          # f32 matmul accumulator
    b += r * _round_up(wo, 8) * col * (4 + 2)      # f32 out temp + bf16 cast
    b += 2 * r * _round_up(wo, 8) * col * 2        # y output block (bf16, double-buffered)
    b += 2 * kh * _round_up(ck, 16) * col * 2      # weight block (double-buffered)
    return b


def _post_step_bytes(r, *, wo, cout, pool):
    """Rough per-grid-step VMEM footprint of the BN/act/pool kernel for row tile r."""
    col = _round_up(cout, 128)
    in_rows = 2 * r if pool else r
    ow = wo // 2 if pool else wo
    b = 2 * in_rows * wo * col * 2                 # bf16 y block (double-buffered)
    b += in_rows * wo * col * 4                    # f32 normalized/activated tile
    if pool:
        b += (in_rows // 2) * wo * col * 4         # after H-direction pool
        b += (in_rows // 2) * ow * col * 4         # after W-direction pool
    b += 2 * r * ow * col * 4                      # f32 out block (double-buffered)
    return b


# ----------------------------------------------------------------------------
# Kernel 1: stride-1 conv over one (batch, row-tile) grid cell + partial BN stats.
#   refs: x_ref    (1, TH, Wp, KW*Cin)   bf16  W-unfolded input row tile
#         halo[r]  (1, 1,  Wp, KW*Cin)   bf16  (KH-1) rows directly below the tile
#         w_ref    (KH, KW*Cin, Cout)    bf16
#         y_ref    (1, TH, Wo, Cout)     bf16  conv output tile
#         stat_ref (1, 1, 2, Cout)       f32   [sum(y), sum(y*y)] per channel
# ----------------------------------------------------------------------------
def _conv_kernel(*refs, kh):
    x_ref, *halo_refs, w_ref, y_ref, stat_ref = refs
    _, th, wp, _ = x_ref.shape
    _, _, wo, cout = y_ref.shape

    window = x_ref[0]                                            # (TH, Wp, KW*Cin) bf16
    if halo_refs:
        window = jnp.concatenate([window] + [h[0] for h in halo_refs], axis=0)
    ck = window.shape[-1]
    # Layout-preserving flatten (Wp is a multiple of 16, so bf16 tiles stay aligned).
    x2 = window.reshape(window.shape[0] * wp, ck)

    # KW is already folded into the contraction dim, so the conv is KH back-to-back MXU
    # matmuls over K = KW*Cin; every LHS slice offset (dy*Wp) is sublane-aligned and the
    # pure dot chain keeps the accumulation MRB/MRF-friendly.
    acc = jnp.dot(x2[0:th * wp], w_ref[0], preferred_element_type=jnp.float32)
    for dy in range(1, kh):
        acc = acc + jnp.dot(x2[dy * wp:dy * wp + th * wp], w_ref[dy],
                            preferred_element_type=jnp.float32)

    # Row h*Wp + w of acc holds output pixel (h, w); columns w >= Wo only ever saw the
    # zero alignment padding / shifted-out taps and are sliced away.
    out = acc.reshape(th, wp, cout)[:, :wo, :]                   # (TH, Wo, Cout) f32
    y_ref[...] = out[None].astype(y_ref.dtype)                   # bf16 HBM intermediate

    # Per-tile partial BatchNorm statistics in f32 (computed before the bf16 store), so
    # mean/var need no extra HBM pass over y.
    s1 = jnp.sum(out, axis=(0, 1), keepdims=True)[0]             # (1, Cout)
    s2 = jnp.sum(out * out, axis=(0, 1), keepdims=True)[0]       # (1, Cout)
    stat_ref[0, 0, :, :] = jnp.concatenate([s1, s2], axis=0)     # (2, Cout)


def _halo_index_map(i, j, *, row_tile, r):
    # Single-row block (H block size 1) => the block index IS the element row index.
    return (i, (j + 1) * row_tile + r, 0, 0)


def _conv_pallas(x_kw, w_fold, row_tile, ho, wo, vmem_limit):
    n, _, wp, ck = x_kw.shape
    kh, _, cout = w_fold.shape
    t = ho // row_tile

    in_specs = [pl.BlockSpec((1, row_tile, wp, ck), lambda i, j: (i, j, 0, 0))]
    args = [x_kw]
    for r in range(kh - 1):
        # Overlap ("halo") rows come straight from x_kw via single-row BlockSpecs -- no
        # extra HBM halo array and no wrapper-side gather.
        in_specs.append(pl.BlockSpec(
            (1, 1, wp, ck),
            functools.partial(_halo_index_map, row_tile=row_tile, r=r)))
        args.append(x_kw)
    # TODO(synk): on v7x, pipeline_mode=pl.Buffered(1) on this constant-index weight spec
    # would drop the second resident weight copy and buy a larger row tile.
    in_specs.append(pl.BlockSpec((kh, ck, cout), lambda i, j: (0, 0, 0)))
    args.append(w_fold)

    return pl.pallas_call(
        functools.partial(_conv_kernel, kh=kh),
        out_shape=(jax.ShapeDtypeStruct((n, ho, wo, cout), jnp.bfloat16),
                   jax.ShapeDtypeStruct((n, t, 2, cout), jnp.float32)),
        grid=(n, t),
        in_specs=in_specs,
        out_specs=(pl.BlockSpec((1, row_tile, wo, cout), lambda i, j: (i, j, 0, 0)),
                   pl.BlockSpec((1, 1, 2, cout), lambda i, j: (i, j, 0, 0))),
        compiler_params=pltpu.CompilerParams(
            dimension_semantics=("parallel", "parallel"),
            vmem_limit_bytes=vmem_limit),
    )(*args)


# ----------------------------------------------------------------------------
# Kernel 2: fused BatchNorm affine (pre-folded scale/shift) + LeakyReLU(0.1)
#           [+ 2x2 max-pool], row-tiled; bf16 in, f32 math, f32 out.
# ----------------------------------------------------------------------------
def _bn_act_pool_kernel(y_ref, scale_ref, shift_ref, o_ref, *, pool):
    z = y_ref[0].astype(jnp.float32) * scale_ref[0] + shift_ref[0]   # (TH_in, Wo, C)
    z = jnp.where(z >= 0, z, 0.1 * z)                                # LeakyReLU(0.1)
    if pool:
        h, w, c = z.shape
        z = z.reshape(h // 2, 2, w, c).max(axis=1)       # H-direction pool (outer split, free)
        # TODO(synk): the W split crosses the 8-sublane tile (relayout copy); a
        # pltpu.roll + stride-2 select on the idle XLU slot would avoid it.
        z = z.reshape(h // 2, w // 2, 2, c).max(axis=2)  # W-direction pool
    o_ref[...] = z[None].astype(o_ref.dtype)


def _bn_act_pool_pallas(y, scale, shift, need_pool, row_tile, vmem_limit):
    n, h, w, c = y.shape
    oh, ow = (h // 2, w // 2) if need_pool else (h, w)
    in_rows = 2 * row_tile if need_pool else row_tile
    t = oh // row_tile
    return pl.pallas_call(
        functools.partial(_bn_act_pool_kernel, pool=need_pool),
        out_shape=jax.ShapeDtypeStruct((n, oh, ow, c), jnp.float32),
        grid=(n, t),
        in_specs=[pl.BlockSpec((1, in_rows, w, c), lambda i, j: (i, j, 0, 0)),
                  pl.BlockSpec((1, c), lambda i, j: (0, 0)),
                  pl.BlockSpec((1, c), lambda i, j: (0, 0))],
        out_specs=pl.BlockSpec((1, row_tile, ow, c), lambda i, j: (i, j, 0, 0)),
        compiler_params=pltpu.CompilerParams(
            dimension_semantics=("parallel", "parallel"),
            vmem_limit_bytes=vmem_limit),
    )(y, scale.reshape(1, -1), shift.reshape(1, -1))


def conv2d_block_forward(x_nchw, weight_oihw, bias, gamma, beta, *,
                         kernel_size, need_pool, eps=1e-5,
                         conv_row_tile=None, post_row_tile=None):
    """Forward pass matching the PyTorch `Conv2d` block (training-mode BatchNorm)."""
    kh = kw = int(kernel_size)
    pad = 1 if kernel_size > 1 else 0
    vmem_limit = _vmem_limit_bytes()

    # NCHW -> NHWC, cast to bf16 up front (halves all wrapper padding traffic), then
    # conv zero padding.
    # TODO(synk): keep the surrounding network NHWC/bf16 end-to-end to drop these wrapper
    # passes (and the final NHWC->NCHW transpose) entirely.
    x = jnp.transpose(x_nchw, (0, 2, 3, 1)).astype(jnp.bfloat16)
    x_pad = jnp.pad(x, ((0, 0), (pad, pad), (pad, pad), (0, 0)))
    n, hp, wp0, cin = x_pad.shape
    ho, wo = hp - kh + 1, wp0 - kw + 1

    # Fold the KW taps into the channel (contraction) dim once in the wrapper:
    # x_kw[n, h, w, dx*Cin + c] = x_pad[n, h, w + dx, c].  The conv kernel then needs
    # only KH sublane-aligned slices and KH matmuls with K = KW*Cin.
    if kw > 1:
        shifts = [x_pad] + [
            jnp.pad(x_pad[:, :, dx:, :], ((0, 0), (0, 0), (0, dx), (0, 0)))
            for dx in range(1, kw)]
        x_kw = jnp.concatenate(shifts, axis=-1)
    else:
        x_kw = x_pad
    ck = kw * cin

    # Align the padded row width to 16 so the in-kernel (rows, Wp, CK) -> (rows*Wp, CK)
    # flatten and the dy*Wp slice offsets stay tile-aligned for packed bf16.  The extra
    # zero columns only ever feed discarded (w >= Wo) outputs.
    wp = _round_up(wp0, 16)
    if wp > wp0:
        x_kw = jnp.pad(x_kw, ((0, 0), (0, 0), (0, wp - wp0), (0, 0)))

    w_fold = jnp.transpose(weight_oihw, (2, 3, 1, 0)).reshape(kh, ck, -1)
    w_fold = w_fold.astype(jnp.bfloat16)
    cout = w_fold.shape[-1]

    # NOTE: the conv bias is dropped on purpose -- this block always runs training-mode
    # BatchNorm right after the conv, which subtracts the batch mean, so a per-channel
    # bias cancels exactly.  (Not valid for eval-mode running stats / BN-free use.)
    del bias

    budget = vmem_limit // 2
    if conv_row_tile is None:
        conv_row_tile = _pick_row_tile(
            ho, functools.partial(_conv_step_bytes, wp=wp, ck=ck, cout=cout,
                                  wo=wo, kh=kh), budget)
    assert ho % conv_row_tile == 0, "conv_row_tile must divide the conv output height"

    # Convolution + fused per-tile BatchNorm partial statistics (y stored in bf16).
    y, stats = _conv_pallas(x_kw, w_fold, conv_row_tile, ho, wo, vmem_limit)

    # Batch statistics (biased variance, matching PyTorch's training-mode normalizer).
    # NOTE: E[y^2] - E[y]^2 in f32 can cancel badly for huge N*H*W with large channel
    # means; we clamp at 0 and accept the (documented) risk here.
    s = jnp.sum(stats, axis=(0, 1))                      # (2, Cout)
    count = n * ho * wo
    mean = s[0] / count
    var = jnp.maximum(s[1] / count - mean * mean, 0.0)
    scale = gamma.astype(jnp.float32) / jnp.sqrt(var + eps)
    shift = beta.astype(jnp.float32) - mean * scale

    if need_pool:
        # TODO(synk): PyTorch MaxPool2d(2,2) floors odd spatial sizes; this path needs even.
        assert ho % 2 == 0 and wo % 2 == 0, "MaxPool2d(2,2) path requires even H and W"
        out_h = ho // 2
    else:
        out_h = ho
    if post_row_tile is None:
        post_row_tile = _pick_row_tile(
            out_h, functools.partial(_post_step_bytes, wo=wo, cout=cout,
                                     pool=need_pool), budget)
    assert out_h % post_row_tile == 0, "post_row_tile must divide the output height"

    # Fused normalize + LeakyReLU + (optional) 2x2 max-pool, row-tiled.
    out = _bn_act_pool_pallas(y, scale, shift, need_pool, post_row_tile, vmem_limit)

    # NHWC -> NCHW for API parity with the PyTorch module.
    return jnp.transpose(out, (0, 3, 1, 2))


def _reference(x, w, b, gamma, beta, *, kernel_size, need_pool, eps=1e-5):
    pad = 1 if kernel_size > 1 else 0
    y = lax.conv_general_dilated(
        x, w, window_strides=(1, 1), padding=[(pad, pad), (pad, pad)],
        dimension_numbers=("NCHW", "OIHW", "NCHW"))
    y = y + b[None, :, None, None]
    mean = y.mean(axis=(0, 2, 3))
    var = y.var(axis=(0, 2, 3))
    y = (y - mean[None, :, None, None]) / jnp.sqrt(var + eps)[None, :, None, None]
    y = y * gamma[None, :, None, None] + beta[None, :, None, None]
    y = jnp.where(y >= 0, y, 0.1 * y)
    if need_pool:
        n, c, h, ww = y.shape
        y = y.reshape(n, c, h // 2, 2, ww // 2, 2).max(axis=(3, 5))
    return y


if __name__ == "__main__":
    # Small deterministic setup: batch=2, in_channels=4, out_channels=8, 16x16, k=3, pool.
    N, CIN, COUT, H, W, K = 2, 4, 8, 16, 16, 3
    NEED_POOL = True

    key = jax.random.PRNGKey(0)
    kx, kw_, kb = jax.random.split(key, 3)

    x = jax.random.normal(kx, (N, CIN, H, W), dtype=jnp.float32)

    # Deterministic PyTorch-style init (conv uniform bounds, BN gamma=1 / beta=0).
    fan_in = CIN * K * K
    bound = 1.0 / float(fan_in) ** 0.5
    weight = jax.random.uniform(kw_, (COUT, CIN, K, K), jnp.float32, -bound, bound)
    bias = jax.random.uniform(kb, (COUT,), jnp.float32, -bound, bound)
    gamma = jnp.ones((COUT,), jnp.float32)
    beta = jnp.zeros((COUT,), jnp.float32)

    # Small explicit row tiles so the (batch, row-tile) grid + halo BlockSpecs are
    # actually exercised at this toy 16x16 size (auto-pick would choose a single tile).
    out = conv2d_block_forward(x, weight, bias, gamma, beta,
                               kernel_size=K, need_pool=NEED_POOL,
                               conv_row_tile=8, post_row_tile=4)
    out = jax.block_until_ready(out)

    ref = _reference(x, weight, bias, gamma, beta,
                     kernel_size=K, need_pool=NEED_POOL)
    assert out.shape == (N, COUT, H // 2, W // 2), out.shape
    # bf16 MXU operands + bf16 intermediate y (f32 accumulation & statistics) => loosened
    # tolerance vs the pure-f32 reference.
    err = float(jnp.max(jnp.abs(out - ref)))
    assert jnp.allclose(out, ref, rtol=5e-2, atol=5e-2), err

    print("KERNEL_OK")
</pallas_src>

<mosaic_0001>
module attributes {stable_mosaic.version = 11 : i64} {
  func.func @_conv_kernel(%arg0: i32, %arg1: i32, %arg2: memref<1x8x32x12xbf16, #tpu.memory_space<vmem>>, %arg3: memref<1x1x32x12xbf16, #tpu.memory_space<vmem>>, %arg4: memref<1x1x32x12xbf16, #tpu.memory_space<vmem>>, %arg5: memref<3x12x8xbf16, #tpu.memory_space<vmem>>, %arg6: memref<1x8x16x8xbf16, #tpu.memory_space<vmem>>, %arg7: memref<1x1x2x8xf32, #tpu.memory_space<vmem>>) attributes {dimension_semantics = [#tpu.dimension_semantics<parallel>, #tpu.dimension_semantics<parallel>], iteration_bounds = array<i64: 2, 2>, scalar_prefetch = 0 : i64, scratch_operands = 0 : i64, tpu.core_type = #tpu.core_type<tc>, window_params = [{transform_indices = @transform_0, window_bounds = array<i64: 1, 8, 32, 12>}, {transform_indices = @transform_1, window_bounds = array<i64: 1, 1, 32, 12>}, {transform_indices = @transform_2, window_bounds = array<i64: 1, 1, 32, 12>}, {pipeline_mode = #tpu.pipeline_mode<synchronous>, transform_indices = @transform_3, window_bounds = array<i64: 3, 12, 8>}, {transform_indices = @transform_4, window_bounds = array<i64: 1, 8, 16, 8>}, {transform_indices = @transform_5, window_bounds = array<i64: 1, 1, 2, 8>}]} {
    %c0 = arith.constant 0 : index
    %c0_0 = arith.constant 0 : index
    %c0_1 = arith.constant 0 : index
    %c0_2 = arith.constant 0 : index
    %0 = vector.load %arg2[%c0, %c0_0, %c0_1, %c0_2] : memref<1x8x32x12xbf16, #tpu.memory_space<vmem>>, vector<1x8x32x12xbf16>
    %1 = vector.shape_cast %0 : vector<1x8x32x12xbf16> to vector<8x32x12xbf16>
    %c0_3 = arith.constant 0 : index
    %c0_4 = arith.constant 0 : index
    %c0_5 = arith.constant 0 : index
    %c0_6 = arith.constant 0 : index
    %2 = vector.load %arg3[%c0_3, %c0_4, %c0_5, %c0_6] : memref<1x1x32x12xbf16, #tpu.memory_space<vmem>>, vector<1x1x32x12xbf16>
    %3 = vector.shape_cast %2 : vector<1x1x32x12xbf16> to vector<1x32x12xbf16>
    %c0_7 = arith.constant 0 : index
    %c0_8 = arith.constant 0 : index
    %c0_9 = arith.constant 0 : index
    %c0_10 = arith.constant 0 : index
    %4 = vector.load %arg4[%c0_7, %c0_8, %c0_9, %c0_10] : memref<1x1x32x12xbf16, #tpu.memory_space<vmem>>, vector<1x1x32x12xbf16>
    %5 = vector.shape_cast %4 : vector<1x1x32x12xbf16> to vector<1x32x12xbf16>
    %6 = tpu.concatenate %1, %3, %5 in 0 : vector<8x32x12xbf16>, vector<1x32x12xbf16>, vector<1x32x12xbf16> -> vector<10x32x12xbf16>
    %7 = vector.shape_cast %6 : vector<10x32x12xbf16> to vector<320x12xbf16>
    %8 = vector.extract_strided_slice %7 {offsets = [0, 0], sizes = [256, 12], strides = [1, 1]} : vector<320x12xbf16> to vector<256x12xbf16>
    %c0_11 = arith.constant 0 : index
    %c0_12 = arith.constant 0 : index
    %c0_13 = arith.constant 0 : index
    %9 = vector.load %arg5[%c0_11, %c0_12, %c0_13] : memref<3x12x8xbf16, #tpu.memory_space<vmem>>, vector<1x12x8xbf16>
    %10 = vector.shape_cast %9 : vector<1x12x8xbf16> to vector<12x8xbf16>
    %cst = arith.constant dense<0.000000e+00> : vector<256x8xf32>
    %11 = tpu.matmul %8, %10, %cst {dimension_numbers = #tpu.dot_dimension_numbers<[1], [0], [0], [1], [0, 0, 1, 1], [], []>} : vector<256x12xbf16>, vector<12x8xbf16>, vector<256x8xf32> -> vector<256x8xf32>
    %12 = vector.extract_strided_slice %7 {offsets = [32, 0], sizes = [256, 12], strides = [1, 1]} : vector<320x12xbf16> to vector<256x12xbf16>
    %c1 = arith.constant 1 : index
    %c0_14 = arith.constant 0 : index
    %c0_15 = arith.constant 0 : index
    %13 = vector.load %arg5[%c1, %c0_14, %c0_15] : memref<3x12x8xbf16, #tpu.memory_space<vmem>>, vector<1x12x8xbf16>
    %14 = vector.shape_cast %13 : vector<1x12x8xbf16> to vector<12x8xbf16>
    %cst_16 = arith.constant dense<0.000000e+00> : vector<256x8xf32>
    %15 = tpu.matmul %12, %14, %cst_16 {dimension_numbers = #tpu.dot_dimension_numbers<[1], [0], [0], [1], [0, 0, 1, 1], [], []>} : vector<256x12xbf16>, vector<12x8xbf16>, vector<256x8xf32> -> vector<256x8xf32>
    %16 = arith.addf %11, %15 : vector<256x8xf32>
    %17 = vector.extract_strided_slice %7 {offsets = [64, 0], sizes = [256, 12], strides = [1, 1]} : vector<320x12xbf16> to vector<256x12xbf16>
    %c2 = arith.constant 2 : index
    %c0_17 = arith.constant 0 : index
    %c0_18 = arith.constant 0 : index
    %18 = vector.load %arg5[%c2, %c0_17, %c0_18] : memref<3x12x8xbf16, #tpu.memory_space<vmem>>, vector<1x12x8xbf16>
    %19 = vector.shape_cast %18 : vector<1x12x8xbf16> to vector<12x8xbf16>
    %cst_19 = arith.constant dense<0.000000e+00> : vector<256x8xf32>
    %20 = tpu.matmul %17, %19, %cst_19 {dimension_numbers = #tpu.dot_dimension_numbers<[1], [0], [0], [1], [0, 0, 1, 1], [], []>} : vector<256x12xbf16>, vector<12x8xbf16>, vector<256x8xf32> -> vector<256x8xf32>
    %21 = arith.addf %16, %20 : vector<256x8xf32>
    %22 = vector.shape_cast %21 : vector<256x8xf32> to vector<8x32x8xf32>
    %23 = vector.extract_strided_slice %22 {offsets = [0, 0, 0], sizes = [8, 16, 8], strides = [1, 1, 1]} : vector<8x32x8xf32> to vector<8x16x8xf32>
    %24 = vector.shape_cast %23 : vector<8x16x8xf32> to vector<1x8x16x8xf32>
    %25 = arith.truncf %24 : vector<1x8x16x8xf32> to vector<1x8x16x8xbf16>
    %c0_20 = arith.constant 0 : index
    %c0_21 = arith.constant 0 : index
    %c0_22 = arith.constant 0 : index
    %c0_23 = arith.constant 0 : index
    %26 = vector.load %arg6[%c0_20, %c0_21, %c0_22, %c0_23] : memref<1x8x16x8xbf16, #tpu.memory_space<vmem>>, vector<1x8x16x8xbf16>
    tpu.vector_store %arg6[%c0_20, %c0_21, %c0_22, %c0_23], %25 {strides = array<i32>} : memref<1x8x16x8xbf16, #tpu.memory_space<vmem>>, vector<1x8x16x8xbf16>,
    %cst_24 = arith.constant dense<0.000000e+00> : vector<8xf32>
    %27 = vector.multi_reduction <add>, %23, %cst_24 [0, 1] : vector<8x16x8xf32> to vector<8xf32>
    %28 = vector.shape_cast %27 : vector<8xf32> to vector<1x1x8xf32>
    %29 = vector.shape_cast %28 : vector<1x1x8xf32> to vector<1x8xf32>
    %30 = arith.mulf %23, %23 : vector<8x16x8xf32>
    %cst_25 = arith.constant dense<0.000000e+00> : vector<8xf32>
    %31 = vector.multi_reduction <add>, %30, %cst_25 [0, 1] : vector<8x16x8xf32> to vector<8xf32>
    %32 = vector.shape_cast %31 : vector<8xf32> to vector<1x1x8xf32>
    %33 = vector.shape_cast %32 : vector<1x1x8xf32> to vector<1x8xf32>
    %34 = tpu.concatenate %29, %33 in 0 : vector<1x8xf32>, vector<1x8xf32> -> vector<2x8xf32>
    %c0_26 = arith.constant 0 : index
    %c0_27 = arith.constant 0 : index
    %c0_28 = arith.constant 0 : index
    %c0_29 = arith.constant 0 : index
    %35 = vector.load %arg7[%c0_26, %c0_27, %c0_28, %c0_29] : memref<1x1x2x8xf32, #tpu.memory_space<vmem>>, vector<1x1x2x8xf32>
    %36 = vector.shape_cast %35 : vector<1x1x2x8xf32> to vector<2x8xf32>
    %37 = vector.shape_cast %34 : vector<2x8xf32> to vector<1x1x2x8xf32>
    tpu.vector_store %arg7[%c0_26, %c0_27, %c0_28, %c0_29], %37 {strides = array<i32>} : memref<1x1x2x8xf32, #tpu.memory_space<vmem>>, vector<1x1x2x8xf32>,
    return
  }
  func.func @transform_0(%arg0: i32, %arg1: i32) -> (i32, i32, i32, i32) {
    %c0_i32 = arith.constant 0 : i32
    %c0_i32_0 = arith.constant 0 : i32
    %c0_i32_1 = arith.constant 0 : i32
    return %arg0, %arg1, %c0_i32, %c0_i32_0 : i32, i32, i32, i32
  }
  func.func @transform_1(%arg0: i32, %arg1: i32) -> (i32, i32, i32, i32) {
    %c1_i32 = arith.constant 1 : i32
    %0 = arith.addi %arg1, %c1_i32 : i32
    %c8_i32 = arith.constant 8 : i32
    %1 = arith.muli %0, %c8_i32 : i32
    %c0_i32 = arith.constant 0 : i32
    %2 = arith.addi %1, %c0_i32 : i32
    %c0_i32_0 = arith.constant 0 : i32
    %c0_i32_1 = arith.constant 0 : i32
    %c0_i32_2 = arith.constant 0 : i32
    return %arg0, %2, %c0_i32_0, %c0_i32_1 : i32, i32, i32, i32
  }
  func.func @transform_2(%arg0: i32, %arg1: i32) -> (i32, i32, i32, i32) {
    %c1_i32 = arith.constant 1 : i32
    %0 = arith.addi %arg1, %c1_i32 : i32
    %c8_i32 = arith.constant 8 : i32
    %1 = arith.muli %0, %c8_i32 : i32
    %c1_i32_0 = arith.constant 1 : i32
    %2 = arith.addi %1, %c1_i32_0 : i32
    %c0_i32 = arith.constant 0 : i32
    %c0_i32_1 = arith.constant 0 : i32
    %c0_i32_2 = arith.constant 0 : i32
    return %arg0, %2, %c0_i32, %c0_i32_1 : i32, i32, i32, i32
  }
  func.func @transform_3(%arg0: i32, %arg1: i32) -> (i32, i32, i32) {
    %c0_i32 = arith.constant 0 : i32
    %c0_i32_0 = arith.constant 0 : i32
    %c0_i32_1 = arith.constant 0 : i32
    %c0_i32_2 = arith.constant 0 : i32
    return %c0_i32, %c0_i32_0, %c0_i32_1 : i32, i32, i32
  }
  func.func @transform_4(%arg0: i32, %arg1: i32) -> (i32, i32, i32, i32) {
    %c0_i32 = arith.constant 0 : i32
    %c0_i32_0 = arith.constant 0 : i32
    %c0_i32_1 = arith.constant 0 : i32
    return %arg0, %arg1, %c0_i32, %c0_i32_0 : i32, i32, i32, i32
  }
  func.func @transform_5(%arg0: i32, %arg1: i32) -> (i32, i32, i32, i32) {
    %c0_i32 = arith.constant 0 : i32
    %c0_i32_0 = arith.constant 0 : i32
    %c0_i32_1 = arith.constant 0 : i32
    return %arg0, %arg1, %c0_i32, %c0_i32_0 : i32, i32, i32, i32
  }
}

</mosaic_0001>

<llo_original>
// kernel: tpu_custom_call.1
$region0: #{tpu_custom_call.1}
  #allocation0 [shape = 'u32[]', space=smem, size = 0x4, offset = 0x4, fixed_abs, tag = 'smem constant byte address 0x4 - core index']
  #allocation1 [shape = 'u32[144,128]{1,0:T(1,128)}', space=vmem, size = 0x12000, scoped, tag = 'internal scratch']
  %s0 = inlined_call_operand.vmem [shape: bf16[2,18,32,12], index: 0, kind: input, shape index: {}]
  %s1 = inlined_call_operand.vmem [shape: bf16[2,18,32,12], index: 1, kind: input, shape index: {}]
  %s2 = inlined_call_operand.vmem [shape: bf16[2,18,32,12], index: 2, kind: input, shape index: {}]
  %s3 = inlined_call_operand.vmem [shape: bf16[3,12,8], index: 3, kind: input, shape index: {}]
  %s4 = inlined_call_operand.vmem [shape: bf16[2,16,16,8], index: 4, kind: output, shape index: {0}]
  %s5 = inlined_call_operand.hbm [shape: f32[2,2,2,8], index: 5, kind: output, shape index: {1}]
  %6 = xla_tuple %s4, %s5
  %s7 = sld [smem:[#allocation0]]
  $region57: #{tpu_custom_call.1} parent=0
    _
  %s9 = ssub.s32 1, %s7
  %s10 = scalar_select 0, %s9, %s7
  $region1: #{tpu_custom_call.1} parent=0
    #allocation2 [shape = 'u8[2048]{0}', space=vmem, size = 0x800, scoped, tag = 'output window, operand 1']
    #allocation3 [shape = 's32[2]{0}', space=sflag, size = 0x8, scoped, tag = 'scoped memory for tpu_custom_call.1']
    %11 = vsyncpa [#allocation3], 0
    %s12 = scalar_lea.sflag [#allocation3], 1
    %13 = vsyncpa %s12, 0
    loop: start=0, step=1, limit=6
    $region2: #{tpu_custom_call.1} parent=1 // loop_pre_header
      _
    $region3: #{tpu_custom_call.1} parent=1 // loop_header
      %s15 = sphi 0, %s19
      %p16 = scmp.ge.s32.totalorder %s15, 6
      %s22 = sphi 0, %s34
      %s23 = sphi 0, %s30
      %s24 = sphi 0, %s22
      %s25 = sphi 0, %s23
      %s26 = sphi 0, %s24
      %s27 = sphi 0, %s25
      %s39 = sphi 0, %s41
      %s42 = sphi 0, %s39
      %s43 = sphi 0, %s42
      %s59 = sphi 0, %s43
      %s71 = sphi 0, %s73
      %s74 = sphi 0, %s71
      %s75 = sphi 0, %s74
      %s91 = sphi 0, %s75
      %s105 = sphi 0, %s107
      %s108 = sphi 0, %s105
      %s109 = sphi 0, %s108
      %s125 = sphi 0, %s109
      %s129 = sphi 0, %s129
      %s131 = sphi 0, %s129
      %s132 = sphi 0, %s131
      %s146 = sphi 0, %s132
      %s154 = sphi 0, %s156
      %s157 = sphi 0, %s154
      %s158 = sphi 0, %s157
      %s174 = sphi 0, %s158
      %s182 = sphi 0, %s184
      %s185 = sphi 0, %s182
      %s186 = sphi 0, %s185
      %s202 = sphi 0, %s186
    $region4: #{tpu_custom_call.1} parent=1 // loop_header_branch
      %18 = sbr.rel (%p16) target = $region8
    $region5: #{tpu_custom_call.1} parent=1 // loop_body
      %s20 = ssub.s32 %s15, 1
      %s21 = ssub.s32 %s15, 2
      %s28 = sadd.s32 1, %s23
      %p29 = scmp.ge.s32.totalorder %s28, 2
      %s30 = scalar_select %p29, 0, %s28
      %s31 = sadd.s32 1, %s22
      %s32 = scalar_select %p29, %s31, %s22
      %p33 = scmp.ge.s32.totalorder %s32, 2
      %s34 = scalar_select %p33, 0, %s32
      %s35 = ssub.s32 %s22, %s34
      %s36 = ssub.s32 %s23, %s30
      %s37 = sor.u32 %s35, %s36
      %p38 = scmp.eq.s32.totalorder %s37, 0
      %s40 = sadd.s32 %s39, 1
      %s41 = scalar_select %p38, %s39, %s40
      %p44 = pneg %p38
      %p45 = scmp.eq.s32.totalorder %s15, 3
      %p46 = por %p44, %p45
      %p47 = scmp.ne.s32.totalorder %s39, %s42
      %p48 = scmp.eq.s32.totalorder %s15, 0
      %p49 = por %p47, %p48
      %p50 = scmp.ne.s32.totalorder %s39, %s42
      %p51 = scmp.eq.s32.totalorder %s20, 3
      %p52 = por %p50, %p51
      %p53 = scmp.ne.s32.totalorder %s42, %s43
      %p54 = scmp.eq.s32.totalorder %s20, 0
      %p55 = por %p53, %p54
      %p56 = scmp.ne.s32.totalorder %s42, %s43
      %p57 = scmp.eq.s32.totalorder %s21, 3
      %p58 = por %p56, %p57
      %p60 = scmp.ne.s32.totalorder %s43, %s59
      %p61 = scmp.eq.s32.totalorder %s21, 0
      %p62 = por %p60, %p61
      %s63 = sadd.s32 %s23, 1
      %s64 = smul.u32 %s63, 8
      %s65 = sadd.s32 %s30, 1
      %s66 = smul.u32 %s65, 8
      %s67 = ssub.s32 %s22, %s34
      %s68 = ssub.s32 %s64, %s66
      %s69 = sor.u32 %s67, %s68
      %p70 = scmp.eq.s32.totalorder %s69, 0
      %s72 = sadd.s32 %s71, 1
      %s73 = scalar_select %p70, %s71, %s72
      %p76 = pneg %p70
      %p77 = scmp.eq.s32.totalorder %s15, 3
      %p78 = por %p76, %p77
      %p79 = scmp.ne.s32.totalorder %s71, %s74
      %p80 = scmp.eq.s32.totalorder %s15, 0
      %p81 = por %p79, %p80
      %p82 = scmp.ne.s32.totalorder %s71, %s74
      %p83 = scmp.eq.s32.totalorder %s20, 3
      %p84 = por %p82, %p83
      %p85 = scmp.ne.s32.totalorder %s74, %s75
      %p86 = scmp.eq.s32.totalorder %s20, 0
      %p87 = por %p85, %p86
      %p88 = scmp.ne.s32.totalorder %s74, %s75
      %p89 = scmp.eq.s32.totalorder %s21, 3
      %p90 = por %p88, %p89
      %p92 = scmp.ne.s32.totalorder %s75, %s91
      %p93 = scmp.eq.s32.totalorder %s21, 0
      %p94 = por %p92, %p93
      %s95 = sadd.s32 %s23, 1
      %s96 = smul.u32 %s95, 8
      %s97 = sadd.s32 %s96, 1
      %s98 = sadd.s32 %s30, 1
      %s99 = smul.u32 %s98, 8
      %s100 = sadd.s32 %s99, 1
      %s101 = ssub.s32 %s22, %s34
      %s102 = ssub.s32 %s97, %s100
      %s103 = sor.u32 %s101, %s102
      %p104 = scmp.eq.s32.totalorder %s103, 0
      %s106 = sadd.s32 %s105, 1
      %s107 = scalar_select %p104, %s105, %s106
      %p110 = pneg %p104
      %p111 = scmp.eq.s32.totalorder %s15, 3
      %p112 = por %p110, %p111
      %p113 = scmp.ne.s32.totalorder %s105, %s108
      %p114 = scmp.eq.s32.totalorder %s15, 0
      %p115 = por %p113, %p114
      %p116 = scmp.ne.s32.totalorder %s105, %s108
      %p117 = scmp.eq.s32.totalorder %s20, 3
      %p118 = por %p116, %p117
      %p119 = scmp.ne.s32.totalorder %s108, %s109
      %p120 = scmp.eq.s32.totalorder %s20, 0
      %p121 = por %p119, %p120
      %p122 = scmp.ne.s32.totalorder %s108, %s109
      %p123 = scmp.eq.s32.totalorder %s21, 3
      %p124 = por %p122, %p123
      %p126 = scmp.ne.s32.totalorder %s109, %s125
      %p127 = scmp.eq.s32.totalorder %s21, 0
      %p128 = por %p126, %p127
      %s130 = sadd.s32 %s129, 1
      %p133 = scmp.eq.s32.totalorder %s15, 3
      %p134 = scmp.ne.s32.totalorder %s129, %s131
      %p135 = scmp.eq.s32.totalorder %s15, 0
      %p136 = por %p134, %p135
      %p137 = scmp.ne.s32.totalorder %s129, %s131
      %p138 = scmp.eq.s32.totalorder %s20, 3
      %p139 = por %p137, %p138
      %p140 = scmp.ne.s32.totalorder %s131, %s132
      %p141 = scmp.eq.s32.totalorder %s20, 0
      %p142 = por %p140, %p141
      %p143 = scmp.ne.s32.totalorder %s131, %s132
      %p144 = scmp.eq.s32.totalorder %s21, 3
      %p145 = por %p143, %p144
      %p147 = scmp.ne.s32.totalorder %s132, %s146
      %p148 = scmp.eq.s32.totalorder %s21, 0
      %p149 = por %p147, %p148
      %s150 = ssub.s32 %s22, %s34
      %s151 = ssub.s32 %s23, %s30
      %s152 = sor.u32 %s150, %s151
      %p153 = scmp.eq.s32.totalorder %s152, 0
      %s155 = sadd.s32 %s154, 1
      %s156 = scalar_select %p153, %s154, %s155
      %p159 = pneg %p153
      %p160 = scmp.eq.s32.totalorder %s15, 3
      %p161 = por %p159, %p160
      %p162 = scmp.ne.s32.totalorder %s154, %s157
      %p163 = scmp.eq.s32.totalorder %s15, 0
      %p164 = por %p162, %p163
      %p165 = scmp.ne.s32.totalorder %s154, %s157
      %p166 = scmp.eq.s32.totalorder %s20, 3
      %p167 = por %p165, %p166
      %p168 = scmp.ne.s32.totalorder %s157, %s158
      %p169 = scmp.eq.s32.totalorder %s20, 0
      %p170 = por %p168, %p169
      %p171 = scmp.ne.s32.totalorder %s157, %s158
      %p172 = scmp.eq.s32.totalorder %s21, 3
      %p173 = por %p171, %p172
      %p175 = scmp.ne.s32.totalorder %s158, %s174
      %p176 = scmp.eq.s32.totalorder %s21, 0
      %p177 = por %p175, %p176
      %s178 = ssub.s32 %s22, %s34
      %s179 = ssub.s32 %s23, %s30
      %s180 = sor.u32 %s178, %s179
      %p181 = scmp.eq.s32.totalorder %s180, 0
      %s183 = sadd.s32 %s182, 1
      %s184 = scalar_select %p181, %s182, %s183
      %p187 = pneg %p181
      %p188 = scmp.eq.s32.totalorder %s15, 3
      %p189 = por %p187, %p188
      %p190 = scmp.ne.s32.totalorder %s182, %s185
      %p191 = scmp.eq.s32.totalorder %s15, 0
      %p192 = por %p190, %p191
      %p193 = scmp.ne.s32.totalorder %s182, %s185
      %p194 = scmp.eq.s32.totalorder %s20, 3
      %p195 = por %p193, %p194
      %p196 = scmp.ne.s32.totalorder %s185, %s186
      %p197 = scmp.eq.s32.totalorder %s20, 0
      %p198 = por %p196, %p197
      %p199 = scmp.ne.s32.totalorder %s185, %s186
      %p200 = scmp.eq.s32.totalorder %s21, 3
      %p201 = por %p199, %p200
      %p203 = scmp.ne.s32.totalorder %s186, %s202
      %p204 = scmp.eq.s32.totalorder %s21, 0
      %p205 = por %p203, %p204
      %p206 = scmp.le.s32.totalorder 1, %s15
      %p207 = scmp.lt.s32.totalorder %s15, 5
      %p208 = pnand %p206, %p207
      %p209 = pneg %p208
      // Predicated region
      $region9: #{tpu_custom_call.1} parent=5 // pred_check
        _
      $region10: #{tpu_custom_call.1} parent=5 // pred_check_branch
        %211 = sbr.rel (%p208) target = $region12
      $region11: #{tpu_custom_call.1} parent=5 // pred_region
        %s212 = ssub.s32 %s15, 1
        // Predicated region
        $region13: #{tpu_custom_call.1} parent=11 // pred_check
          %p213 = pneg %p142
        $region14: #{tpu_custom_call.1} parent=11 // pred_check_branch
          %215 = sbr.rel (%p213) target = $region16
        $region15: #{tpu_custom_call.1} parent=11 // pred_region
          _
        $region16: #{tpu_custom_call.1} parent=11 // pred_fallthru
          _
      $region12: #{tpu_custom_call.1} parent=5 // pred_fallthru
        _
      %p216 = scmp.lt.s32.totalorder %s15, 4
      // Predicated region
      $region17: #{tpu_custom_call.1} parent=5 // pred_check
        %p217 = pneg %p216
      $region18: #{tpu_custom_call.1} parent=5 // pred_check_branch
        %219 = sbr.rel (%p217) target = $region20
      $region19: #{tpu_custom_call.1} parent=5 // pred_region
        // Predicated region
        $region21: #{tpu_custom_call.1} parent=19 // pred_check
          %p220 = pneg %p49
        $region22: #{tpu_custom_call.1} parent=19 // pred_check_branch
          %222 = sbr.rel (%p220) target = $region24
        $region23: #{tpu_custom_call.1} parent=19 // pred_region
          %s223 = smul.u32 8, %s23
          %s224 = ssub.s32 18, %s223
          %p225 = scmp.lt.s32.totalorder %s224, 8
          %s226 = scalar_select %p225, %s224, 8
          %s227 = smul.u32 64, %s226
          %s228 = smul.u32 %s227, 4
          %p229 = scmp.lt.s32.totalorder %s22, 1
          %s230 = scalar_select %p229, %s22, 1
          %p231 = scmp.lt.s32.totalorder %s223, 17
          %s232 = scalar_select %p231, %s223, 17
          %s233 = smul.addr %s232, 4
          %s234 = smul.addr %s230, 72
          %s235 = sadd.s32 %s233, %s234
          %s236 = smul.addr %s235, 4
          %s237 = scalar_lea.vmem %s0, %s236
          %s238 = smul.u32 8, %s23
          %s239 = ssub.s32 18, %s238
          %p240 = scmp.lt.s32.totalorder %s239, 8
          %s241 = scalar_select %p240, %s239, 8
          %s242 = smul.u32 64, %s241
          %s243 = smul.u32 %s242, 4
        $region24: #{tpu_custom_call.1} parent=19 // pred_fallthru
          _
        // Predicated region
        $region25: #{tpu_custom_call.1} parent=19 // pred_check
          %p244 = pneg %p81
        $region26: #{tpu_custom_call.1} parent=19 // pred_check_branch
          %246 = sbr.rel (%p244) target = $region28
        $region27: #{tpu_custom_call.1} parent=19 // pred_region
          %s247 = sadd.s32 %s23, 1
          %s248 = smul.u32 %s247, 8
          %p249 = scmp.lt.s32.totalorder %s22, 1
          %s250 = scalar_select %p249, %s22, 1
          %p251 = scmp.lt.s32.totalorder %s248, 17
          %s252 = scalar_select %p251, %s248, 17
          %s253 = smul.addr %s252, 4
          %s254 = smul.addr %s250, 72
          %s255 = sadd.s32 %s253, %s254
          %s256 = smul.addr %s255, 4
          %s257 = scalar_lea.vmem %s1, %s256
          %s258 = sadd.s32 %s23, 1
          %s259 = smul.u32 %s258, 8
        $region28: #{tpu_custom_call.1} parent=19 // pred_fallthru
          _
        // Predicated region
        $region29: #{tpu_custom_call.1} parent=19 // pred_check
          %p260 = pneg %p115
        $region30: #{tpu_custom_call.1} parent=19 // pred_check_branch
          %262 = sbr.rel (%p260) target = $region32
        $region31: #{tpu_custom_call.1} parent=19 // pred_region
          %s263 = sadd.s32 %s23, 1
          %s264 = smul.u32 %s263, 8
          %s265 = sadd.s32 %s264, 1
          %p266 = scmp.lt.s32.totalorder %s22, 1
          %s267 = scalar_select %p266, %s22, 1
          %p268 = scmp.lt.s32.totalorder %s265, 17
          %s269 = scalar_select %p268, %s265, 17
          %s270 = smul.addr %s269, 4
          %s271 = smul.addr %s267, 72
          %s272 = sadd.s32 %s270, %s271
          %s273 = smul.addr %s272, 4
          %s274 = scalar_lea.vmem %s2, %s273
          %s275 = sadd.s32 %s23, 1
          %s276 = smul.u32 %s275, 8
          %s277 = sadd.s32 %s276, 1
        $region32: #{tpu_custom_call.1} parent=19 // pred_fallthru
          _
      $region20: #{tpu_custom_call.1} parent=5 // pred_fallthru
        _
      %p278 = scmp.le.s32.totalorder 1, %s15
      %p279 = scmp.lt.s32.totalorder %s15, 5
      %p280 = pnand %p278, %p279
      %p281 = pneg %p280
      // Predicated region
      $region33: #{tpu_custom_call.1} parent=5 // pred_check
        _
      $region34: #{tpu_custom_call.1} parent=5 // pred_check_branch
        %283 = sbr.rel (%p280) target = $region36
      $region35: #{tpu_custom_call.1} parent=5 // pred_region
        %s284 = ssub.s32 %s15, 1
        %s285 = smul.u32 8, %s25
        %s286 = ssub.s32 18, %s285
        %p287 = scmp.lt.s32.totalorder %s286, 8
        %s288 = scalar_select %p287, %s286, 8
        %s289 = smul.u32 64, %s288
        %s290 = smul.u32 %s289, 4
        %p291 = scmp.lt.s32.totalorder %s24, 1
        %s292 = scalar_select %p291, %s24, 1
        %p293 = scmp.lt.s32.totalorder %s285, 17
        %s294 = scalar_select %p293, %s285, 17
        %s295 = smul.addr %s294, 4
        %s296 = smul.addr %s292, 72
        %s297 = sadd.s32 %s295, %s296
        %s298 = smul.addr %s297, 4
        %s299 = scalar_lea.vmem %s0, %s298
        %p300 = pneg %p55
        %p301 = pneg %p52
        %s302 = sadd.s32 %s25, 1
        %s303 = smul.u32 %s302, 8
        %p304 = scmp.lt.s32.totalorder %s24, 1
        %s305 = scalar_select %p304, %s24, 1
        %p306 = scmp.lt.s32.totalorder %s303, 17
        %s307 = scalar_select %p306, %s303, 17
        %s308 = smul.addr %s307, 4
        %s309 = smul.addr %s305, 72
        %s310 = sadd.s32 %s308, %s309
        %s311 = smul.addr %s310, 4
        %s312 = scalar_lea.vmem %s1, %s311
        %p313 = pneg %p87
        %p314 = pneg %p84
        %s315 = sadd.s32 %s25, 1
        %s316 = smul.u32 %s315, 8
        %s317 = sadd.s32 %s316, 1
        %p318 = scmp.lt.s32.totalorder %s24, 1
        %s319 = scalar_select %p318, %s24, 1
        %p320 = scmp.lt.s32.totalorder %s317, 17
        %s321 = scalar_select %p320, %s317, 17
        %s322 = smul.addr %s321, 4
        %s323 = smul.addr %s319, 72
        %s324 = sadd.s32 %s322, %s323
        %s325 = smul.addr %s324, 4
        %s326 = scalar_lea.vmem %s2, %s325
        %p327 = pneg %p121
        %p328 = pneg %p118
        %p329 = pneg %p142
        %p330 = pneg %p139
        %p331 = pneg %p170
        %p332 = pneg %p167
        %s333 = smul.u32 8, %s25
        %p334 = scmp.lt.s32.totalorder %s24, 1
        %s335 = scalar_select %p334, %s24, 1
        %p336 = scmp.lt.s32.totalorder %s333, 15
        %s337 = scalar_select %p336, %s333, 15
        %s338 = smul.addr %s337, 2
        %s339 = smul.addr %s335, 32
        %s340 = sadd.s32 %s338, %s339
        %s341 = smul.addr %s340, 4
        %s342 = scalar_lea.vmem %s4, %s341
        %p343 = pneg %p198
        %p344 = pneg %p195
        %s345 = sand.u32 %s185, 1
        %s346 = scalar_lea.sflag [#allocation3], %s345
        %s347 = sand.u32 %s185, 1
        %s348 = smul.addr %s347, 2
        %s349 = scalar_lea.vmem [#allocation2], %s348
        %s350 = smul.u32 8, %s25
        %s351 = ssub.s32 18, %s350
        %p352 = scmp.lt.s32.totalorder %s351, 8
        %s353 = scalar_select %p352, %s351, 8
        %s354 = smul.u32 64, %s353
        %s355 = smul.u32 %s354, 4
        %p356 = scmp.lt.s32.totalorder %s24, 1
        %s357 = scalar_select %p356, %s24, 1
        %p358 = scmp.lt.s32.totalorder %s350, 17
        %s359 = scalar_select %p358, %s350, 17
        %s360 = smul.addr %s359, 4
        %s361 = smul.addr %s357, 72
        %s362 = sadd.s32 %s360, %s361
        %s363 = smul.addr %s362, 4
        %s364 = scalar_lea.vmem %s0, %s363
        %s365 = smul.u32 8, %s25
        %s366 = ssub.s32 18, %s365
        %p367 = scmp.lt.s32.totalorder %s366, 8
        %s368 = scalar_select %p367, %s366, 8
        %s369 = smul.u32 64, %s368
        %s370 = smul.u32 %s369, 4
        %s371 = sadd.s32 %s25, 1
        %s372 = smul.u32 %s371, 8
        %p373 = scmp.lt.s32.totalorder %s24, 1
        %s374 = scalar_select %p373, %s24, 1
        %p375 = scmp.lt.s32.totalorder %s372, 17
        %s376 = scalar_select %p375, %s372, 17
        %s377 = smul.addr %s376, 4
        %s378 = smul.addr %s374, 72
        %s379 = sadd.s32 %s377, %s378
        %s380 = smul.addr %s379, 4
        %s381 = scalar_lea.vmem %s1, %s380
        %s382 = sadd.s32 %s25, 1
        %s383 = smul.u32 %s382, 8
        %s384 = sadd.s32 %s25, 1
        %s385 = smul.u32 %s384, 8
        %s386 = sadd.s32 %s385, 1
        %p387 = scmp.lt.s32.totalorder %s24, 1
        %s388 = scalar_select %p387, %s24, 1
        %p389 = scmp.lt.s32.totalorder %s386, 17
        %s390 = scalar_select %p389, %s386, 17
        %s391 = smul.addr %s390, 4
        %s392 = smul.addr %s388, 72
        %s393 = sadd.s32 %s391, %s392
        %s394 = smul.addr %s393, 4
        %s395 = scalar_lea.vmem %s2, %s394
        %s396 = sadd.s32 %s25, 1
        %s397 = smul.u32 %s396, 8
        %s398 = sadd.s32 %s397, 1
        %s399 = smul.u32 8, %s25
        %p400 = scmp.lt.s32.totalorder %s24, 1
        %s401 = scalar_select %p400, %s24, 1
        %p402 = scmp.lt.s32.totalorder %s399, 15
        %s403 = scalar_select %p402, %s399, 15
        %s404 = smul.addr %s403, 2
        %s405 = smul.addr %s401, 32
        %s406 = sadd.s32 %s404, %s405
        %s407 = smul.addr %s406, 4
        %s408 = scalar_lea.vmem %s4, %s407
        %s409 = smul.u32 8, %s25
        %v411 = vld [vmem:[%s364] sm:$0xf]
        %v412 = vld [vmem:[%s364 + $0x4] sm:$0xf]
        %v413 = vld [vmem:[%s364 + $0x8] sm:$0xf]
        %v414 = vld [vmem:[%s364 + $0xc] sm:$0xf]
        %v415 = vld [vmem:[%s364 + $0x10] sm:$0xf]
        %v416 = vld [vmem:[%s364 + $0x14] sm:$0xf]
        %v417 = vld [vmem:[%s364 + $0x18] sm:$0xf]
        %v418 = vld [vmem:[%s364 + $0x1c] sm:$0xf]
        %v419 = vld [vmem:[%s364 + $0x20] sm:$0xf]
        %v420 = vld [vmem:[%s364 + $0x24] sm:$0xf]
        %v421 = vld [vmem:[%s364 + $0x28] sm:$0xf]
        %v422 = vld [vmem:[%s364 + $0x2c] sm:$0xf]
        %v423 = vld [vmem:[%s364 + $0x30] sm:$0xf]
        %v424 = vld [vmem:[%s364 + $0x34] sm:$0xf]
        %v425 = vld [vmem:[%s364 + $0x38] sm:$0xf]
        %v426 = vld [vmem:[%s364 + $0x3c] sm:$0xf]
        %v427 = vld [vmem:[%s364 + $0x40] sm:$0xf]
        %v428 = vld [vmem:[%s364 + $0x44] sm:$0xf]
        %v429 = vld [vmem:[%s364 + $0x48] sm:$0xf]
        %v430 = vld [vmem:[%s364 + $0x4c] sm:$0xf]
        %v431 = vld [vmem:[%s364 + $0x50] sm:$0xf]
        %v432 = vld [vmem:[%s364 + $0x54] sm:$0xf]
        %v433 = vld [vmem:[%s364 + $0x58] sm:$0xf]
        %v434 = vld [vmem:[%s364 + $0x5c] sm:$0xf]
        %v435 = vld [vmem:[%s364 + $0x60] sm:$0xf]
        %v436 = vld [vmem:[%s364 + $0x64] sm:$0xf]
        %v437 = vld [vmem:[%s364 + $0x68] sm:$0xf]
        %v438 = vld [vmem:[%s364 + $0x6c] sm:$0xf]
        %v439 = vld [vmem:[%s364 + $0x70] sm:$0xf]
        %v440 = vld [vmem:[%s364 + $0x74] sm:$0xf]
        %v441 = vld [vmem:[%s364 + $0x78] sm:$0xf]
        %v442 = vld [vmem:[%s364 + $0x7c] sm:$0xf]
        %v443 = vld [vmem:[%s381] sm:$0xf]
        %v444 = vld [vmem:[%s381 + $0x4] sm:$0xf]
        %v445 = vld [vmem:[%s381 + $0x8] sm:$0xf]
        %v446 = vld [vmem:[%s381 + $0xc] sm:$0xf]
        %v447 = vld [vmem:[%s395] sm:$0xf]
        %v448 = vld [vmem:[%s395 + $0x4] sm:$0xf]
        %v449 = vld [vmem:[%s395 + $0x8] sm:$0xf]
        %v450 = vld [vmem:[%s395 + $0xc] sm:$0xf]
        %v451 = vld [vmem:[%s3] sm:$0xf]
        %v452 = vld [vmem:[%s3 + $0x4] sm:$0x3]
        %s453 = scalar_lea.vmem %s3, 8
        %v454 = vld [vmem:[%s453] sm:$0xf]
        %v455 = vld [vmem:[%s453 + $0x4] sm:$0x3]
        %v488 = vunpack.c.l.b16 %v415
        %v489 = vunpack.c.l.b16 %v416
        %v490 = vunpack.c.l.b16 %v417
        %v491 = vunpack.c.l.b16 %v418
        %v492 = vunpack.c.l.b16 %v419
        %v493 = vunpack.c.l.b16 %v420
        %v494 = vunpack.c.l.b16 %v421
        %v495 = vunpack.c.l.b16 %v422
        %v496 = vunpack.c.l.b16 %v423
        %v497 = vunpack.c.l.b16 %v424
        %v498 = vunpack.c.l.b16 %v425
        %v499 = vunpack.c.l.b16 %v426
        %v500 = vunpack.c.l.b16 %v427
        %v501 = vunpack.c.l.b16 %v428
        %v502 = vunpack.c.l.b16 %v429
        %v503 = vunpack.c.l.b16 %v430
        %v504 = vunpack.c.l.b16 %v431
        %v505 = vunpack.c.l.b16 %v432
        %v506 = vunpack.c.l.b16 %v433
        %v507 = vunpack.c.l.b16 %v434
        %v508 = vunpack.c.l.b16 %v435
        %v509 = vunpack.c.l.b16 %v436
        %v510 = vunpack.c.l.b16 %v437
        %v511 = vunpack.c.l.b16 %v438
        %v512 = vunpack.c.l.b16 %v439
        %v513 = vunpack.c.l.b16 %v440
        %v514 = vunpack.c.l.b16 %v441
        %v515 = vunpack.c.l.b16 %v442
        %v516 = vunpack.c.l.b16 %v443
        %v517 = vunpack.c.l.b16 %v444
        %v518 = vunpack.c.l.b16 %v445
        %v519 = vunpack.c.l.b16 %v446
        %v520 = vpack.c.b16 %v489, %v488
        %v521 = vpack.c.b16 %v491, %v490
        %v522 = vpack.c.b16 %v493, %v492
        %v523 = vpack.c.b16 %v495, %v494
        %v524 = vpack.c.b16 %v497, %v496
        %v525 = vpack.c.b16 %v499, %v498
        %v526 = vpack.c.b16 %v501, %v500
        %v527 = vpack.c.b16 %v503, %v502
        %v528 = vpack.c.b16 %v505, %v504
        %v529 = vpack.c.b16 %v507, %v506
        %v530 = vpack.c.b16 %v509, %v508
        %v531 = vpack.c.b16 %v511, %v510
        %v532 = vpack.c.b16 %v513, %v512
        %v533 = vpack.c.b16 %v515, %v514
        %v534 = vpack.c.b16 %v517, %v516
        %v535 = vpack.c.b16 %v519, %v518
        %v538 = vunpack.c.l.b16 %v454
        %v539 = vunpack.c.l.b16 %v455
        %v540 = vpack.c.b16 %v539, %v538
        %vm541 = vcmask 97280
        %v543 = vsel %vm541, %v520, 0
        %v546 = vsel %vm541, %v521, 0
        %v549 = vsel %vm541, %v522, 0
        %v552 = vsel %vm541, %v523, 0
        %v555 = vsel %vm541, %v524, 0
        %v558 = vsel %vm541, %v525, 0
        %v561 = vsel %vm541, %v526, 0
        %v564 = vsel %vm541, %v527, 0
        %v567 = vsel %vm541, %v528, 0
        %v570 = vsel %vm541, %v529, 0
        %v573 = vsel %vm541, %v530, 0
        %v576 = vsel %vm541, %v531, 0
        %v579 = vsel %vm541, %v532, 0
        %v582 = vsel %vm541, %v533, 0
        %v585 = vsel %vm541, %v534, 0
        %v588 = vsel %vm541, %v535, 0
        %vm590 = vcmask 1045504
        %v592 = vsel %vm590, %v540, 0
        %594 = vmatprep.subr.bf16.mxu0 0
        %595 = vmatpush1.bf16.msra.mxu0 %v592
        %596 = vmatprep.subr.bf16.mxu0 0
        %597 = vmatpush1.bf16.msra.mxu0 0
        %598 = vmatprep.subr.bf16.mxu0 0
        %599 = vmatpush1.bf16.msra.mxu0 0
        %600 = vmatprep.subr.bf16.mxu0 0
        %601 = vmatpush1.bf16.msra.mxu0 0
        %602 = vmatprep.subr.bf16.mxu0 0
        %603 = vmatpush1.bf16.msra.mxu0 0
        %604 = vmatprep.subr.bf16.mxu0 0
        %605 = vmatpush1.bf16.msra.mxu0 0
        %606 = vmatprep.subr.bf16.mxu0 0
        %607 = vmatpush1.bf16.msra.mxu0 0
        %608 = vmatprep.subr.bf16.mxu0 0
        %609 = vmatpush1.bf16.msra.mxu0 0
        %610 = vmatprep.subr.bf16.mxu0 0
        %611 = vmatpush1.bf16.msra.mxu0 0
        %612 = vmatprep.subr.bf16.mxu0 0
        %613 = vmatpush1.bf16.msra.mxu0 0
        %614 = vmatprep.subr.bf16.mxu0 0
        %615 = vmatpush1.bf16.msra.mxu0 0
        %616 = vmatprep.subr.bf16.mxu0 0
        %617 = vmatpush1.bf16.msra.mxu0 0
        %618 = vmatprep.subr.bf16.mxu0 0
        %619 = vmatpush1.bf16.msra.mxu0 0
        %620 = vmatprep.subr.bf16.mxu0 0
        %621 = vmatpush1.bf16.msra.mxu0 0
        %622 = vmatprep.subr.bf16.mxu0 0
        %623 = vmatpush1.bf16.msra.mxu0 0
        %624 = vmatprep.subr.bf16.mxu0 0
        %625 = vmatpush1.bf16.msra.mxu0 0
        %626 = vmatprep.mubr.bf16.mxu0 0
        %627 = vmatmul.mubr.bf16.gmra.mrb[0].mxu0 %v543
        %v628 = vpop.f32.mrb[0].mxu0
        %v629 = vadd.f32 0.0, %v628
        %v630 = vpop.f32.mrb[0].mxu0
        %v631 = vpop.f32.mrb[0].mxu0
        %v632 = vadd.f32 0.0, %v631
        %v633 = vpop.f32.mrb[0].mxu0
        %634 = vmatprep.mubr.bf16.mxu0 0
        %635 = vmatmul.mubr.bf16.gmra.mrb[0].mxu0 %v546
        %v636 = vpop.f32.mrb[0].mxu0
        %v637 = vpop.f32.mrb[0].mxu0
        %v638 = vpop.f32.mrb[0].mxu0
        %v639 = vpop.f32.mrb[0].mxu0
        %640 = vmatprep.mubr.bf16.mxu0 0
        %641 = vmatmul.mubr.bf16.gmra.mrb[0].mxu0 %v549
        %v642 = vpop.f32.mrb[0].mxu0
        %v643 = vadd.f32 0.0, %v642
        %v644 = vpop.f32.mrb[0].mxu0
        %v645 = vpop.f32.mrb[0].mxu0
        %v646 = vadd.f32 0.0, %v645
        %v647 = vpop.f32.mrb[0].mxu0
        %648 = vmatprep.mubr.bf16.mxu0 0
        %649 = vmatmul.mubr.bf16.gmra.mrb[0].mxu0 %v552
        %v650 = vpop.f32.mrb[0].mxu0
        %v651 = vpop.f32.mrb[0].mxu0
        %v652 = vpop.f32.mrb[0].mxu0
        %v653 = vpop.f32.mrb[0].mxu0
        %654 = vmatprep.mubr.bf16.mxu0 0
        %655 = vmatmul.mubr.bf16.gmra.mrb[0].mxu0 %v555
        %v656 = vpop.f32.mrb[0].mxu0
        %v657 = vadd.f32 0.0, %v656
        %v658 = vpop.f32.mrb[0].mxu0
        %v659 = vpop.f32.mrb[0].mxu0
        %v660 = vadd.f32 0.0, %v659
        %v661 = vpop.f32.mrb[0].mxu0
        %662 = vmatprep.mubr.bf16.mxu0 0
        %663 = vmatmul.mubr.bf16.gmra.mrb[0].mxu0 %v558
        %v664 = vpop.f32.mrb[0].mxu0
        %v665 = vpop.f32.mrb[0].mxu0
        %v666 = vpop.f32.mrb[0].mxu0
        %v667 = vpop.f32.mrb[0].mxu0
        %668 = vmatprep.mubr.bf16.mxu0 0
        %669 = vmatmul.mubr.bf16.gmra.mrb[0].mxu0 %v561
        %v670 = vpop.f32.mrb[0].mxu0
        %v671 = vadd.f32 0.0, %v670
        %v672 = vpop.f32.mrb[0].mxu0
        %v673 = vpop.f32.mrb[0].mxu0
        %v674 = vadd.f32 0.0, %v673
        %v675 = vpop.f32.mrb[0].mxu0
        %676 = vmatprep.mubr.bf16.mxu0 0
        %677 = vmatmul.mubr.bf16.gmra.mrb[0].mxu0 %v564
        %v678 = vpop.f32.mrb[0].mxu0
        %v679 = vpop.f32.mrb[0].mxu0
        %v680 = vpop.f32.mrb[0].mxu0
        %v681 = vpop.f32.mrb[0].mxu0
        %682 = vmatprep.mubr.bf16.mxu0 0
        %683 = vmatmul.mubr.bf16.gmra.mrb[0].mxu0 %v567
        %v684 = vpop.f32.mrb[0].mxu0
        %v685 = vadd.f32 0.0, %v684
        %v686 = vpop.f32.mrb[0].mxu0
        %v687 = vpop.f32.mrb[0].mxu0
        %v688 = vadd.f32 0.0, %v687
        %v689 = vpop.f32.mrb[0].mxu0
        %690 = vmatprep.mubr.bf16.mxu0 0
        %691 = vmatmul.mubr.bf16.gmra.mrb[0].mxu0 %v570
        %v692 = vpop.f32.mrb[0].mxu0
        %v693 = vpop.f32.mrb[0].mxu0
        %v694 = vpop.f32.mrb[0].mxu0
        %v695 = vpop.f32.mrb[0].mxu0
        %696 = vmatprep.mubr.bf16.mxu0 0
        %697 = vmatmul.mubr.bf16.gmra.mrb[0].mxu0 %v573
        %v698 = vpop.f32.mrb[0].mxu0
        %v699 = vadd.f32 0.0, %v698
        %v700 = vpop.f32.mrb[0].mxu0
        %v701 = vpop.f32.mrb[0].mxu0
        %v702 = vadd.f32 0.0, %v701
        %v703 = vpop.f32.mrb[0].mxu0
        %704 = vmatprep.mubr.bf16.mxu0 0
        %705 = vmatmul.mubr.bf16.gmra.mrb[0].mxu0 %v576
        %v706 = vpop.f32.mrb[0].mxu0
        %v707 = vpop.f32.mrb[0].mxu0
        %v708 = vpop.f32.mrb[0].mxu0
        %v709 = vpop.f32.mrb[0].mxu0
        %710 = vmatprep.mubr.bf16.mxu0 0
        %711 = vmatmul.mubr.bf16.gmra.mrb[0].mxu0 %v579
        %v712 = vpop.f32.mrb[0].mxu0
        %v713 = vadd.f32 0.0, %v712
        %v714 = vpop.f32.mrb[0].mxu0
        %v715 = vpop.f32.mrb[0].mxu0
        %v716 = vadd.f32 0.0, %v715
        %v717 = vpop.f32.mrb[0].mxu0
        %718 = vmatprep.mubr.bf16.mxu0 0
        %719 = vmatmul.mubr.bf16.gmra.mrb[0].mxu0 %v582
        %v720 = vpop.f32.mrb[0].mxu0
        %v721 = vpop.f32.mrb[0].mxu0
        %v722 = vpop.f32.mrb[0].mxu0
        %v723 = vpop.f32.mrb[0].mxu0
        %724 = vmatprep.mubr.bf16.mxu0 0
        %725 = vmatmul.mubr.bf16.gmra.mrb[0].mxu0 %v585
        %v726 = vpop.f32.mrb[0].mxu0
        %v727 = vadd.f32 0.0, %v726
        %v728 = vpop.f32.mrb[0].mxu0
        %v729 = vpop.f32.mrb[0].mxu0
        %v730 = vadd.f32 0.0, %v729
        %v731 = vpop.f32.mrb[0].mxu0
        %732 = vmatprep.mubr.bf16.mxu0 0
        %733 = vmatmul.mubr.bf16.gmra.mrb[0].mxu0 %v588
        %v734 = vpop.f32.mrb[0].mxu0
        %v735 = vpop.f32.mrb[0].mxu0
        %v736 = vpop.f32.mrb[0].mxu0
        %v737 = vpop.f32.mrb[0].mxu0
        %738 = vdwg.mxu0
        %v743 = vunpack.c.l.b16 %v411
        %v744 = vunpack.c.l.b16 %v412
        %v745 = vunpack.c.l.b16 %v413
        %v746 = vunpack.c.l.b16 %v414
        %v747 = vpack.c.b16 %v744, %v743
        %v748 = vpack.c.b16 %v746, %v745
        %v751 = vunpack.c.l.b16 %v451
        %v752 = vunpack.c.l.b16 %v452
        %v753 = vpack.c.b16 %v752, %v751
        %v755 = vsel %vm541, %v747, 0
        %v758 = vsel %vm541, %v748, 0
        %v761 = vsel %vm590, %v753, 0
        %763 = vmatprep.subr.bf16.mxu0 0
        %764 = vmatpush1.bf16.msra.mxu0 %v761
        %765 = vmatprep.subr.bf16.mxu0 0
        %766 = vmatpush1.bf16.msra.mxu0 0
        %767 = vmatprep.subr.bf16.mxu0 0
        %768 = vmatpush1.bf16.msra.mxu0 0
        %769 = vmatprep.subr.bf16.mxu0 0
        %770 = vmatpush1.bf16.msra.mxu0 0
        %771 = vmatprep.subr.bf16.mxu0 0
        %772 = vmatpush1.bf16.msra.mxu0 0
        %773 = vmatprep.subr.bf16.mxu0 0
        %774 = vmatpush1.bf16.msra.mxu0 0
        %775 = vmatprep.subr.bf16.mxu0 0
        %776 = vmatpush1.bf16.msra.mxu0 0
        %777 = vmatprep.subr.bf16.mxu0 0
        %778 = vmatpush1.bf16.msra.mxu0 0
        %779 = vmatprep.subr.bf16.mxu0 0
        %780 = vmatpush1.bf16.msra.mxu0 0
        %781 = vmatprep.subr.bf16.mxu0 0
        %782 = vmatpush1.bf16.msra.mxu0 0
        %783 = vmatprep.subr.bf16.mxu0 0
        %784 = vmatpush1.bf16.msra.mxu0 0
        %785 = vmatprep.subr.bf16.mxu0 0
        %786 = vmatpush1.bf16.msra.mxu0 0
        %787 = vmatprep.subr.bf16.mxu0 0
        %788 = vmatpush1.bf16.msra.mxu0 0
        %789 = vmatprep.subr.bf16.mxu0 0
        %790 = vmatpush1.bf16.msra.mxu0 0
        %791 = vmatprep.subr.bf16.mxu0 0
        %792 = vmatpush1.bf16.msra.mxu0 0
        %793 = vmatprep.subr.bf16.mxu0 0
        %794 = vmatpush1.bf16.msra.mxu0 0
        %795 = vmatprep.mubr.bf16.mxu0 0
        %796 = vmatmul.mubr.bf16.gmra.mrb[0].mxu0 %v755
        %v797 = vpop.f32.mrb[0].mxu0
        %v798 = vadd.f32 %v629, %v797
        %v799 = vpop.f32.mrb[0].mxu0
        %v800 = vpop.f32.mrb[0].mxu0
        %v801 = vadd.f32 %v632, %v800
        %v802 = vpop.f32.mrb[0].mxu0
        %803 = vmatprep.mubr.bf16.mxu0 0
        %804 = vmatmul.mubr.bf16.gmra.mrb[0].mxu0 %v758
        %v805 = vpop.f32.mrb[0].mxu0
        %v806 = vpop.f32.mrb[0].mxu0
        %v807 = vpop.f32.mrb[0].mxu0
        %v808 = vpop.f32.mrb[0].mxu0
        %809 = vmatprep.mubr.bf16.mxu0 0
        %810 = vmatmul.mubr.bf16.gmra.mrb[0].mxu0 %v543
        %v811 = vpop.f32.mrb[0].mxu0
        %v812 = vadd.f32 %v643, %v811
        %v813 = vpop.f32.mrb[0].mxu0
        %v814 = vpop.f32.mrb[0].mxu0
        %v815 = vadd.f32 %v646, %v814
        %v816 = vpop.f32.mrb[0].mxu0
        %817 = vmatprep.mubr.bf16.mxu0 0
        %818 = vmatmul.mubr.bf16.gmra.mrb[0].mxu0 %v546
        %v819 = vpop.f32.mrb[0].mxu0
        %v820 = vpop.f32.mrb[0].mxu0
        %v821 = vpop.f32.mrb[0].mxu0
        %v822 = vpop.f32.mrb[0].mxu0
        %823 = vmatprep.mubr.bf16.mxu0 0
        %824 = vmatmul.mubr.bf16.gmra.mrb[0].mxu0 %v549
        %v825 = vpop.f32.mrb[0].mxu0
        %v826 = vadd.f32 %v657, %v825
        %v827 = vpop.f32.mrb[0].mxu0
        %v828 = vpop.f32.mrb[0].mxu0
        %v829 = vadd.f32 %v660, %v828
        %v830 = vpop.f32.mrb[0].mxu0
        %831 = vmatprep.mubr.bf16.mxu0 0
        %832 = vmatmul.mubr.bf16.gmra.mrb[0].mxu0 %v552
        %v833 = vpop.f32.mrb[0].mxu0
        %v834 = vpop.f32.mrb[0].mxu0
        %v835 = vpop.f32.mrb[0].mxu0
        %v836 = vpop.f32.mrb[0].mxu0
        %837 = vmatprep.mubr.bf16.mxu0 0
        %838 = vmatmul.mubr.bf16.gmra.mrb[0].mxu0 %v555
        %v839 = vpop.f32.mrb[0].mxu0
        %v840 = vadd.f32 %v671, %v839
        %v841 = vpop.f32.mrb[0].mxu0
        %v842 = vpop.f32.mrb[0].mxu0
        %v843 = vadd.f32 %v674, %v842
        %v844 = vpop.f32.mrb[0].mxu0
        %845 = vmatprep.mubr.bf16.mxu0 0
        %846 = vmatmul.mubr.bf16.gmra.mrb[0].mxu0 %v558
        %v847 = vpop.f32.mrb[0].mxu0
        %v848 = vpop.f32.mrb[0].mxu0
        %v849 = vpop.f32.mrb[0].mxu0
        %v850 = vpop.f32.mrb[0].mxu0
        %851 = vmatprep.mubr.bf16.mxu0 0
        %852 = vmatmul.mubr.bf16.gmra.mrb[0].mxu0 %v561
        %v853 = vpop.f32.mrb[0].mxu0
        %v854 = vadd.f32 %v685, %v853
        %v855 = vpop.f32.mrb[0].mxu0
        %v856 = vpop.f32.mrb[0].mxu0
        %v857 = vadd.f32 %v688, %v856
        %v858 = vpop.f32.mrb[0].mxu0
        %859 = vmatprep.mubr.bf16.mxu0 0
        %860 = vmatmul.mubr.bf16.gmra.mrb[0].mxu0 %v564
        %v861 = vpop.f32.mrb[0].mxu0
        %v862 = vpop.f32.mrb[0].mxu0
        %v863 = vpop.f32.mrb[0].mxu0
        %v864 = vpop.f32.mrb[0].mxu0
        %865 = vmatprep.mubr.bf16.mxu0 0
        %866 = vmatmul.mubr.bf16.gmra.mrb[0].mxu0 %v567
        %v867 = vpop.f32.mrb[0].mxu0
        %v868 = vadd.f32 %v699, %v867
        %v869 = vpop.f32.mrb[0].mxu0
        %v870 = vpop.f32.mrb[0].mxu0
        %v871 = vadd.f32 %v702, %v870
        %v872 = vpop.f32.mrb[0].mxu0
        %873 = vmatprep.mubr.bf16.mxu0 0
        %874 = vmatmul.mubr.bf16.gmra.mrb[0].mxu0 %v570
        %v875 = vpop.f32.mrb[0].mxu0
        %v876 = vpop.f32.mrb[0].mxu0
        %v877 = vpop.f32.mrb[0].mxu0
        %v878 = vpop.f32.mrb[0].mxu0
        %879 = vmatprep.mubr.bf16.mxu0 0
        %880 = vmatmul.mubr.bf16.gmra.mrb[0].mxu0 %v573
        %v881 = vpop.f32.mrb[0].mxu0
        %v882 = vadd.f32 %v713, %v881
        %v883 = vpop.f32.mrb[0].mxu0
        %v884 = vpop.f32.mrb[0].mxu0
        %v885 = vadd.f32 %v716, %v884
        %v886 = vpop.f32.mrb[0].mxu0
        %887 = vmatprep.mubr.bf16.mxu0 0
        %888 = vmatmul.mubr.bf16.gmra.mrb[0].mxu0 %v576
        %v889 = vpop.f32.mrb[0].mxu0
        %v890 = vpop.f32.mrb[0].mxu0
        %v891 = vpop.f32.mrb[0].mxu0
        %v892 = vpop.f32.mrb[0].mxu0
        %893 = vmatprep.mubr.bf16.mxu0 0
        %894 = vmatmul.mubr.bf16.gmra.mrb[0].mxu0 %v579
        %v895 = vpop.f32.mrb[0].mxu0
        %v896 = vadd.f32 %v727, %v895
        %v897 = vpop.f32.mrb[0].mxu0
        %v898 = vpop.f32.mrb[0].mxu0
        %v899 = vadd.f32 %v730, %v898
        %v900 = vpop.f32.mrb[0].mxu0
        %901 = vmatprep.mubr.bf16.mxu0 0
        %902 = vmatmul.mubr.bf16.gmra.mrb[0].mxu0 %v582
        %v903 = vpop.f32.mrb[0].mxu0
        %v904 = vpop.f32.mrb[0].mxu0
        %v905 = vpop.f32.mrb[0].mxu0
        %v906 = vpop.f32.mrb[0].mxu0
        %907 = vdwg.mxu0
        %s908 = scalar_lea.vmem %s3, 16
        %v909 = vld [vmem:[%s908] sm:$0xf]
        %v910 = vld [vmem:[%s908 + $0x4] sm:$0x3]
        %v915 = vunpack.c.l.b16 %v447
        %v916 = vunpack.c.l.b16 %v448
        %v917 = vunpack.c.l.b16 %v449
        %v918 = vunpack.c.l.b16 %v450
        %v919 = vpack.c.b16 %v916, %v915
        %v920 = vpack.c.b16 %v918, %v917
        %v923 = vunpack.c.l.b16 %v909
        %v924 = vunpack.c.l.b16 %v910
        %v925 = vpack.c.b16 %v924, %v923
        %v927 = vsel %vm541, %v919, 0
        %v930 = vsel %vm541, %v920, 0
        %v933 = vsel %vm590, %v925, 0
        %935 = vmatprep.subr.bf16.mxu0 0
        %936 = vmatpush1.bf16.msra.mxu0 %v933
        %937 = vmatprep.subr.bf16.mxu0 0
        %938 = vmatpush1.bf16.msra.mxu0 0
        %939 = vmatprep.subr.bf16.mxu0 0
        %940 = vmatpush1.bf16.msra.mxu0 0
        %941 = vmatprep.subr.bf16.mxu0 0
        %942 = vmatpush1.bf16.msra.mxu0 0
        %943 = vmatprep.subr.bf16.mxu0 0
        %944 = vmatpush1.bf16.msra.mxu0 0
        %945 = vmatprep.subr.bf16.mxu0 0
        %946 = vmatpush1.bf16.msra.mxu0 0
        %947 = vmatprep.subr.bf16.mxu0 0
        %948 = vmatpush1.bf16.msra.mxu0 0
        %949 = vmatprep.subr.bf16.mxu0 0
        %950 = vmatpush1.bf16.msra.mxu0 0
        %951 = vmatprep.subr.bf16.mxu0 0
        %952 = vmatpush1.bf16.msra.mxu0 0
        %953 = vmatprep.subr.bf16.mxu0 0
        %954 = vmatpush1.bf16.msra.mxu0 0
        %955 = vmatprep.subr.bf16.mxu0 0
        %956 = vmatpush1.bf16.msra.mxu0 0
        %957 = vmatprep.subr.bf16.mxu0 0
        %958 = vmatpush1.bf16.msra.mxu0 0
        %959 = vmatprep.subr.bf16.mxu0 0
        %960 = vmatpush1.bf16.msra.mxu0 0
        %961 = vmatprep.subr.bf16.mxu0 0
        %962 = vmatpush1.bf16.msra.mxu0 0
        %963 = vmatprep.subr.bf16.mxu0 0
        %964 = vmatpush1.bf16.msra.mxu0 0
        %965 = vmatprep.subr.bf16.mxu0 0
        %966 = vmatpush1.bf16.msra.mxu0 0
        %967 = vmatprep.mubr.bf16.mxu0 0
        %968 = vmatmul.mubr.bf16.gmra.mrb[0].mxu0 %v549
        %v969 = vpop.f32.mrb[0].mxu0
        %v970 = vadd.f32 0.0, %v969
        %v971 = vpop.f32.mrb[0].mxu0
        %v972 = vpop.f32.mrb[0].mxu0
        %v973 = vadd.f32 0.0, %v972
        %v974 = vpop.f32.mrb[0].mxu0
        %975 = vmatprep.mubr.bf16.mxu0 0
        %976 = vmatmul.mubr.bf16.gmra.mrb[0].mxu0 %v552
        %v977 = vpop.f32.mrb[0].mxu0
        %v978 = vpop.f32.mrb[0].mxu0
        %v979 = vpop.f32.mrb[0].mxu0
        %v980 = vpop.f32.mrb[0].mxu0
        %981 = vmatprep.mubr.bf16.mxu0 0
        %982 = vmatmul.mubr.bf16.gmra.mrb[0].mxu0 %v555
        %v983 = vpop.f32.mrb[0].mxu0
        %v984 = vadd.f32 0.0, %v983
        %v985 = vpop.f32.mrb[0].mxu0
        %v986 = vpop.f32.mrb[0].mxu0
        %v987 = vadd.f32 0.0, %v986
        %v988 = vpop.f32.mrb[0].mxu0
        %989 = vmatprep.mubr.bf16.mxu0 0
        %990 = vmatmul.mubr.bf16.gmra.mrb[0].mxu0 %v558
        %v991 = vpop.f32.mrb[0].mxu0
        %v992 = vpop.f32.mrb[0].mxu0
        %v993 = vpop.f32.mrb[0].mxu0
        %v994 = vpop.f32.mrb[0].mxu0
        %995 = vmatprep.mubr.bf16.mxu0 0
        %996 = vmatmul.mubr.bf16.gmra.mrb[0].mxu0 %v561
        %v997 = vpop.f32.mrb[0].mxu0
        %v998 = vadd.f32 0.0, %v997
        %v999 = vpop.f32.mrb[0].mxu0
        %v1000 = vpop.f32.mrb[0].mxu0
        %v1001 = vadd.f32 0.0, %v1000
        %v1002 = vpop.f32.mrb[0].mxu0
        %1003 = vmatprep.mubr.bf16.mxu0 0
        %1004 = vmatmul.mubr.bf16.gmra.mrb[0].mxu0 %v564
        %v1005 = vpop.f32.mrb[0].mxu0
        %v1006 = vpop.f32.mrb[0].mxu0
        %v1007 = vpop.f32.mrb[0].mxu0
        %v1008 = vpop.f32.mrb[0].mxu0
        %1009 = vmatprep.mubr.bf16.mxu0 0
        %1010 = vmatmul.mubr.bf16.gmra.mrb[0].mxu0 %v567
        %v1011 = vpop.f32.mrb[0].mxu0
        %v1012 = vadd.f32 0.0, %v1011
        %v1013 = vpop.f32.mrb[0].mxu0
        %v1014 = vpop.f32.mrb[0].mxu0
        %v1015 = vadd.f32 0.0, %v1014
        %v1016 = vpop.f32.mrb[0].mxu0
        %1017 = vmatprep.mubr.bf16.mxu0 0
        %1018 = vmatmul.mubr.bf16.gmra.mrb[0].mxu0 %v570
        %v1019 = vpop.f32.mrb[0].mxu0
        %v1020 = vpop.f32.mrb[0].mxu0
        %v1021 = vpop.f32.mrb[0].mxu0
        %v1022 = vpop.f32.mrb[0].mxu0
        %1023 = vmatprep.mubr.bf16.mxu0 0
        %1024 = vmatmul.mubr.bf16.gmra.mrb[0].mxu0 %v573
        %v1025 = vpop.f32.mrb[0].mxu0
        %v1026 = vadd.f32 0.0, %v1025
        %v1027 = vpop.f32.mrb[0].mxu0
        %v1028 = vpop.f32.mrb[0].mxu0
        %v1029 = vadd.f32 0.0, %v1028
        %v1030 = vpop.f32.mrb[0].mxu0
        %1031 = vmatprep.mubr.bf16.mxu0 0
        %1032 = vmatmul.mubr.bf16.gmra.mrb[0].mxu0 %v576
        %v1033 = vpop.f32.mrb[0].mxu0
        %v1034 = vpop.f32.mrb[0].mxu0
        %v1035 = vpop.f32.mrb[0].mxu0
        %v1036 = vpop.f32.mrb[0].mxu0
        %1037 = vmatprep.mubr.bf16.mxu0 0
        %1038 = vmatmul.mubr.bf16.gmra.mrb[0].mxu0 %v579
        %v1039 = vpop.f32.mrb[0].mxu0
        %v1040 = vadd.f32 0.0, %v1039
        %v1041 = vpop.f32.mrb[0].mxu0
        %v1042 = vpop.f32.mrb[0].mxu0
        %v1043 = vadd.f32 0.0, %v1042
        %v1044 = vpop.f32.mrb[0].mxu0
        %1045 = vmatprep.mubr.bf16.mxu0 0
        %1046 = vmatmul.mubr.bf16.gmra.mrb[0].mxu0 %v582
        %v1047 = vpop.f32.mrb[0].mxu0
        %v1048 = vpop.f32.mrb[0].mxu0
        %v1049 = vpop.f32.mrb[0].mxu0
        %v1050 = vpop.f32.mrb[0].mxu0
        %1051 = vmatprep.mubr.bf16.mxu0 0
        %1052 = vmatmul.mubr.bf16.gmra.mrb[0].mxu0 %v585
        %v1053 = vpop.f32.mrb[0].mxu0
        %v1054 = vadd.f32 0.0, %v1053
        %v1055 = vpop.f32.mrb[0].mxu0
        %v1056 = vpop.f32.mrb[0].mxu0
        %v1057 = vadd.f32 0.0, %v1056
        %v1058 = vpop.f32.mrb[0].mxu0
        %1059 = vmatprep.mubr.bf16.mxu0 0
        %1060 = vmatmul.mubr.bf16.gmra.mrb[0].mxu0 %v588
        %v1061 = vpop.f32.mrb[0].mxu0
        %v1062 = vpop.f32.mrb[0].mxu0
        %v1063 = vpop.f32.mrb[0].mxu0
        %v1064 = vpop.f32.mrb[0].mxu0
        %1065 = vmatprep.mubr.bf16.mxu0 0
        %1066 = vmatmul.mubr.bf16.gmra.mrb[0].mxu0 %v927
        %v1067 = vpop.f32.mrb[0].mxu0
        %v1068 = vadd.f32 0.0, %v1067
        %v1069 = vpop.f32.mrb[0].mxu0
        %v1070 = vpop.f32.mrb[0].mxu0
        %v1071 = vadd.f32 0.0, %v1070
        %v1072 = vpop.f32.mrb[0].mxu0
        %1073 = vmatprep.mubr.bf16.mxu0 0
        %1074 = vmatmul.mubr.bf16.gmra.mrb[0].mxu0 %v930
        %v1075 = vpop.f32.mrb[0].mxu0
        %v1076 = vpop.f32.mrb[0].mxu0
        %v1077 = vpop.f32.mrb[0].mxu0
        %v1078 = vpop.f32.mrb[0].mxu0
        %1079 = vdwg.mxu0
        %v1080 = vadd.f32 %v798, %v970
        %v1081 = vadd.f32 %v801, %v973
        %v1082 = vadd.f32 %v812, %v984
        %v1083 = vadd.f32 %v815, %v987
        %v1084 = vadd.f32 %v826, %v998
        %v1085 = vadd.f32 %v829, %v1001
        %v1086 = vadd.f32 %v840, %v1012
        %v1087 = vadd.f32 %v843, %v1015
        %v1088 = vadd.f32 %v854, %v1026
        %v1089 = vadd.f32 %v857, %v1029
        %v1090 = vadd.f32 %v868, %v1040
        %v1091 = vadd.f32 %v871, %v1043
        %v1092 = vadd.f32 %v882, %v1054
        %v1093 = vadd.f32 %v885, %v1057
        %v1094 = vadd.f32 %v896, %v1068
        %v1095 = vadd.f32 %v899, %v1071
        %v1096 = vpack.c.bf16 %v1081, %v1080
        %v1097 = vpack.c.bf16 %v1083, %v1082
        %v1098 = vpack.c.bf16 %v1085, %v1084
        %v1099 = vpack.c.bf16 %v1087, %v1086
        %v1100 = vpack.c.bf16 %v1089, %v1088
        %v1101 = vpack.c.bf16 %v1091, %v1090
        %v1102 = vpack.c.bf16 %v1093, %v1092
        %v1103 = vpack.c.bf16 %v1095, %v1094
        %v1112 = vunpack.c.l.b16 %v1096
        %v1113 = vunpack.c.h.b16 %v1096
        %v1114 = vunpack.c.l.b16 %v1097
        %v1115 = vunpack.c.h.b16 %v1097
        %v1116 = vunpack.c.l.b16 %v1098
        %v1117 = vunpack.c.h.b16 %v1098
        %v1118 = vunpack.c.l.b16 %v1099
        %v1119 = vunpack.c.h.b16 %v1099
        %v1120 = vunpack.c.l.b16 %v1100
        %v1121 = vunpack.c.h.b16 %v1100
        %v1122 = vunpack.c.l.b16 %v1101
        %v1123 = vunpack.c.h.b16 %v1101
        %v1124 = vunpack.c.l.b16 %v1102
        %v1125 = vunpack.c.h.b16 %v1102
        %v1126 = vunpack.c.l.b16 %v1103
        %v1127 = vunpack.c.h.b16 %v1103
        %v1128 = vpack.c.b16 %v1112, %v1112
        %v1129 = vpack.c.b16 %v1113, %v1113
        %v1130 = vpack.c.b16 %v1114, %v1114
        %v1131 = vpack.c.b16 %v1115, %v1115
        %v1132 = vpack.c.b16 %v1116, %v1116
        %v1133 = vpack.c.b16 %v1117, %v1117
        %v1134 = vpack.c.b16 %v1118, %v1118
        %v1135 = vpack.c.b16 %v1119, %v1119
        %v1136 = vpack.c.b16 %v1120, %v1120
        %v1137 = vpack.c.b16 %v1121, %v1121
        %v1138 = vpack.c.b16 %v1122, %v1122
        %v1139 = vpack.c.b16 %v1123, %v1123
        %v1140 = vpack.c.b16 %v1124, %v1124
        %v1141 = vpack.c.b16 %v1125, %v1125
        %v1142 = vpack.c.b16 %v1126, %v1126
        %v1143 = vpack.c.b16 %v1127, %v1127
        %vm1160 = vcmask 60416
        %1161 = vst.msk [vmem:[%s408] sm:$0xf] %vm1160, %v1128
        %1162 = vst.msk [vmem:[%s408 + $0x4] sm:$0xf] %vm1160, %v1129
        %1163 = vst.msk [vmem:[%s408 + $0x8] sm:$0xf] %vm1160, %v1130
        %1164 = vst.msk [vmem:[%s408 + $0xc] sm:$0xf] %vm1160, %v1131
        %1165 = vst.msk [vmem:[%s408 + $0x10] sm:$0xf] %vm1160, %v1132
        %1166 = vst.msk [vmem:[%s408 + $0x14] sm:$0xf] %vm1160, %v1133
        %1167 = vst.msk [vmem:[%s408 + $0x18] sm:$0xf] %vm1160, %v1134
        %1168 = vst.msk [vmem:[%s408 + $0x1c] sm:$0xf] %vm1160, %v1135
        %1169 = vst.msk [vmem:[%s408 + $0x20] sm:$0xf] %vm1160, %v1136
        %1170 = vst.msk [vmem:[%s408 + $0x24] sm:$0xf] %vm1160, %v1137
        %1171 = vst.msk [vmem:[%s408 + $0x28] sm:$0xf] %vm1160, %v1138
        %1172 = vst.msk [vmem:[%s408 + $0x2c] sm:$0xf] %vm1160, %v1139
        %1173 = vst.msk [vmem:[%s408 + $0x30] sm:$0xf] %vm1160, %v1140
        %1174 = vst.msk [vmem:[%s408 + $0x34] sm:$0xf] %vm1160, %v1141
        %1175 = vst.msk [vmem:[%s408 + $0x38] sm:$0xf] %vm1160, %v1142
        %1176 = vst.msk [vmem:[%s408 + $0x3c] sm:$0xf] %vm1160, %v1143
        %vm1177 = vcmask 64512
        %v1178 = vsel %vm1177, %v1080, 0.0
        %v1179 = vsel %vm1177, %v1081, 0.0
        %v1180 = vadd.f32 %v1178, %v1179
        %v1181 = vsel %vm1177, %v1082, 0.0
        %v1182 = vadd.f32 %v1180, %v1181
        %v1183 = vsel %vm1177, %v1083, 0.0
        %v1184 = vadd.f32 %v1182, %v1183
        %v1185 = vsel %vm1177, %v1084, 0.0
        %v1186 = vadd.f32 %v1184, %v1185
        %v1187 = vsel %vm1177, %v1085, 0.0
        %v1188 = vadd.f32 %v1186, %v1187
        %v1189 = vsel %vm1177, %v1086, 0.0
        %v1190 = vadd.f32 %v1188, %v1189
        %v1191 = vsel %vm1177, %v1087, 0.0
        %v1192 = vadd.f32 %v1190, %v1191
        %v1193 = vsel %vm1177, %v1088, 0.0
        %v1194 = vadd.f32 %v1192, %v1193
        %v1195 = vsel %vm1177, %v1089, 0.0
        %v1196 = vadd.f32 %v1194, %v1195
        %v1197 = vsel %vm1177, %v1090, 0.0
        %v1198 = vadd.f32 %v1196, %v1197
        %v1199 = vsel %vm1177, %v1091, 0.0
        %v1200 = vadd.f32 %v1198, %v1199
        %v1201 = vsel %vm1177, %v1092, 0.0
        %v1202 = vadd.f32 %v1200, %v1201
        %v1203 = vsel %vm1177, %v1093, 0.0
        %v1204 = vadd.f32 %v1202, %v1203
        %v1205 = vsel %vm1177, %v1094, 0.0
        %v1206 = vadd.f32 %v1204, %v1205
        %v1207 = vsel %vm1177, %v1095, 0.0
        %v1208 = vadd.f32 %v1206, %v1207
        %v1209 = vrot.slane %v1208, 4
        %v1210 = vadd.f32 %v1208, %v1209
        %v1211 = vrot.slane %v1210, 2
        %v1212 = vadd.f32 %v1210, %v1211
        %v1213 = vrot.slane %v1212, 1
        %v1214 = vadd.f32 %v1212, %v1213
        %v1215 = vmul.f32 %v1080, %v1080
        %v1216 = vmul.f32 %v1081, %v1081
        %v1217 = vmul.f32 %v1082, %v1082
        %v1218 = vmul.f32 %v1083, %v1083
        %v1219 = vmul.f32 %v1084, %v1084
        %v1220 = vmul.f32 %v1085, %v1085
        %v1221 = vmul.f32 %v1086, %v1086
        %v1222 = vmul.f32 %v1087, %v1087
        %v1223 = vmul.f32 %v1088, %v1088
        %v1224 = vmul.f32 %v1089, %v1089
        %v1225 = vmul.f32 %v1090, %v1090
        %v1226 = vmul.f32 %v1091, %v1091
        %v1227 = vmul.f32 %v1092, %v1092
        %v1228 = vmul.f32 %v1093, %v1093
        %v1229 = vmul.f32 %v1094, %v1094
        %v1230 = vmul.f32 %v1095, %v1095
        %v1231 = vsel %vm1177, %v1215, 0.0
        %v1232 = vsel %vm1177, %v1216, 0.0
        %v1233 = vadd.f32 %v1231, %v1232
        %v1234 = vsel %vm1177, %v1217, 0.0
        %v1235 = vadd.f32 %v1233, %v1234
        %v1236 = vsel %vm1177, %v1218, 0.0
        %v1237 = vadd.f32 %v1235, %v1236
        %v1238 = vsel %vm1177, %v1219, 0.0
        %v1239 = vadd.f32 %v1237, %v1238
        %v1240 = vsel %vm1177, %v1220, 0.0
        %v1241 = vadd.f32 %v1239, %v1240
        %v1242 = vsel %vm1177, %v1221, 0.0
        %v1243 = vadd.f32 %v1241, %v1242
        %v1244 = vsel %vm1177, %v1222, 0.0
        %v1245 = vadd.f32 %v1243, %v1244
        %v1246 = vsel %vm1177, %v1223, 0.0
        %v1247 = vadd.f32 %v1245, %v1246
        %v1248 = vsel %vm1177, %v1224, 0.0
        %v1249 = vadd.f32 %v1247, %v1248
        %v1250 = vsel %vm1177, %v1225, 0.0
        %v1251 = vadd.f32 %v1249, %v1250
        %v1252 = vsel %vm1177, %v1226, 0.0
        %v1253 = vadd.f32 %v1251, %v1252
        %v1254 = vsel %vm1177, %v1227, 0.0
        %v1255 = vadd.f32 %v1253, %v1254
        %v1256 = vsel %vm1177, %v1228, 0.0
        %v1257 = vadd.f32 %v1255, %v1256
        %v1258 = vsel %vm1177, %v1229, 0.0
        %v1259 = vadd.f32 %v1257, %v1258
        %v1260 = vsel %vm1177, %v1230, 0.0
        %v1261 = vadd.f32 %v1259, %v1260
        %v1262 = vrot.slane %v1261, 4
        %v1263 = vadd.f32 %v1261, %v1262
        %v1264 = vrot.slane %v1263, 2
        %v1265 = vadd.f32 %v1263, %v1264
        %v1266 = vrot.slane %v1265, 1
        %v1267 = vadd.f32 %v1265, %v1266
        %vm1268 = vcmask 1040384
        %v1269 = vsel %vm1268, %v1214, %v1267
        %vm1270 = vcmask 58368
        %1271 = vst.msk [vmem:[%s349] sm:$0x3] %vm1270, %v1269
        %s1272 = smul.u32 8, %s25
        %p1273 = scmp.lt.s32.totalorder %s24, 1
        %s1274 = scalar_select %p1273, %s24, 1
        %p1275 = scmp.lt.s32.totalorder %s1272, 15
        %s1276 = scalar_select %p1275, %s1272, 15
        %s1277 = smul.addr %s1276, 2
        %s1278 = smul.addr %s1274, 32
        %s1279 = sadd.s32 %s1277, %s1278
        %s1280 = smul.addr %s1279, 4
        %s1281 = scalar_lea.vmem %s4, %s1280
        %s1282 = sand.u32 %s185, 1
        %s1283 = scalar_lea.sflag [#allocation3], %s1282
        %s1284 = sand.u32 %s185, 1
        %s1285 = smul.addr %s1284, 2
        %s1286 = scalar_lea.vmem [#allocation2], %s1285
        // Predicated region
        $region37: #{tpu_custom_call.1} parent=35 // pred_check
          %p1287 = pneg %p167
        $region38: #{tpu_custom_call.1} parent=35 // pred_check_branch
          %1289 = sbr.rel (%p1287) target = $region40
        $region39: #{tpu_custom_call.1} parent=35 // pred_region
          %s1290 = smul.u32 8, %s25
        $region40: #{tpu_custom_call.1} parent=35 // pred_fallthru
          _
        // Predicated region
        $region41: #{tpu_custom_call.1} parent=35 // pred_check
          %p1291 = pneg %p195
        $region42: #{tpu_custom_call.1} parent=35 // pred_check_branch
          %1293 = sbr.rel (%p1291) target = $region44
        $region43: #{tpu_custom_call.1} parent=35 // pred_region
          %s1295 = ssub.s32 32, 32
          %1296 = vsyncadd %s1283, %s1295
          %s1297 = smul.addr %s24, 2
          %s1298 = sadd.s32 %s25, %s1297
          %s1299 = smul.addr %s1298, 32
          %s1300 = scalar_lea.hbm %s5, %s1299
          %s1302 = sshll.u32 %s1286, 4
          %s1303 = int_to_ptr.vmem [resolvable:$true] %s1302
          %1305 = dma.vmem_to_hbm [thread:$0]  %s1303, 32, %s1300, %s1283
        $region44: #{tpu_custom_call.1} parent=35 // pred_fallthru
          _
      $region36: #{tpu_custom_call.1} parent=5 // pred_fallthru
        _
      %p1306 = scmp.le.s32.totalorder 2, %s15
      // Predicated region
      $region45: #{tpu_custom_call.1} parent=5 // pred_check
        %p1307 = pneg %p1306
      $region46: #{tpu_custom_call.1} parent=5 // pred_check_branch
        %1309 = sbr.rel (%p1307) target = $region48
      $region47: #{tpu_custom_call.1} parent=5 // pred_region
        %s1310 = ssub.s32 %s15, 2
        // Predicated region
        $region49: #{tpu_custom_call.1} parent=47 // pred_check
          %p1311 = pneg %p173
        $region50: #{tpu_custom_call.1} parent=47 // pred_check_branch
          %1313 = sbr.rel (%p1311) target = $region52
        $region51: #{tpu_custom_call.1} parent=47 // pred_region
          %s1314 = smul.u32 8, %s27
          %p1315 = scmp.lt.s32.totalorder %s26, 1
          %s1316 = scalar_select %p1315, %s26, 1
          %p1317 = scmp.lt.s32.totalorder %s1314, 15
          %s1318 = scalar_select %p1317, %s1314, 15
          %s1319 = smul.addr %s1318, 2
          %s1320 = smul.addr %s1316, 32
          %s1321 = sadd.s32 %s1319, %s1320
          %s1322 = smul.addr %s1321, 4
          %s1323 = scalar_lea.vmem %s4, %s1322
        $region52: #{tpu_custom_call.1} parent=47 // pred_fallthru
          _
        // Predicated region
        $region53: #{tpu_custom_call.1} parent=47 // pred_check
          %p1324 = pneg %p201
        $region54: #{tpu_custom_call.1} parent=47 // pred_check_branch
          %1326 = sbr.rel (%p1324) target = $region56
        $region55: #{tpu_custom_call.1} parent=47 // pred_region
          %s1327 = sand.u32 %s186, 1
          %s1328 = scalar_lea.sflag [#allocation3], %s1327
          %s1329 = sand.u32 %s186, 1
          %s1330 = smul.addr %s1329, 2
          %s1331 = scalar_lea.vmem [#allocation2], %s1330
          %1332 = dma.done %s1328, 32
        $region56: #{tpu_custom_call.1} parent=47 // pred_fallthru
          _
      $region48: #{tpu_custom_call.1} parent=5 // pred_fallthru
        _
    $region6: #{tpu_custom_call.1} parent=1 // loop_footer
      %s19 = sadd.s32 1, %s15
    $region7: #{tpu_custom_call.1} parent=1 // loop_footer_branch
      %14 = sbr.rel target = $region3
    $region8: #{tpu_custom_call.1} parent=1 // loop_exit
      _
    %1333 = vsyncpa [#allocation3], 1
    %s1334 = scalar_lea.sflag [#allocation3], 1
    %1335 = vsyncpa %s1334, 1

</llo_original>
